<compile_context>
chip_gen: v6e
topology: v6e:2x2x1
jax: 0.10.0
libtpu: 0.0.40
codegen_flags: <defaults>
</compile_context>

<pallas_src>
import functools
import math

import jax
import jax.numpy as jnp
from jax import lax
from jax.experimental import pallas as pl
from jax.experimental.pallas import tpu as pltpu

_IOU_EPS = 1e-7    # eps used inside the (ultralytics-style) CIoU computation
_CAND_EPS = 1e-9   # eps used by get_gt_candidate_mask
_CHUNK = 8         # gt rows processed per inner loop step (f32 sublane count)
_LANE = 128        # TPU lane width
_FAR = -1.0e6      # anchor coordinate for hw-padding columns (outside any box)


def _static_pow(x, p):
    """x ** p for x >= 0 with a static python exponent (square-and-multiply)."""
    p = float(p)
    if p == 0.0:
        return jnp.ones_like(x)
    if p == 1.0:
        return x
    if p.is_integer() and 0 < int(p) <= 16:
        n = int(p)
        result = None
        base = x
        while n:
            if n & 1:
                result = base if result is None else result * base
            n >>= 1
            if n:
                base = base * base
        return result
    return jnp.where(x > 0, jnp.exp(p * jnp.log(jnp.maximum(x, 1e-30))), 0.0)


def _tal_kernel(pd_boxes_ref, pd_scores_ref, gt_boxes_ref, gt_cls_ref,
                anch_ref, mask_gt_ref, atan_gt_ref, atan_pd_ref,
                agt_boxes_ref, agt_cls_ref, fg_ref, tgt_ref, norm_ref,
                align_s, ious_s, kth_s,
                *, n_chunks, hw, n_cls, topk, alpha, beta, eps, topk_dtype):
    f32 = jnp.float32
    wd = topk_dtype
    O_pad = n_chunks * _CHUNK

    pd = pd_boxes_ref[0]           # (4, hw)   predicted xyxy, coords on sublanes
    sc = pd_scores_ref[0]          # (n_cls, hw)
    anch = anch_ref[...]           # (2, hw)
    atp = atan_pd_ref[0]           # (1, hw)   arctan(w_pd / h_pd)

    x1p = pd[0:1, :]; y1p = pd[1:2, :]; x2p = pd[2:3, :]; y2p = pd[3:4, :]
    ax = anch[0:1, :]; ay = anch[1:2, :]

    # gt-invariant CIoU subexpressions (hoisted out of the chunk loop)
    w2 = x2p - x1p
    h2 = y2p - y1p + _IOU_EPS
    area2 = w2 * h2
    sxp = x1p + x2p
    syp = y1p + y2p

    row_l = lax.broadcasted_iota(jnp.int32, (_CHUNK, hw), 0)     # local gt row
    cls_iota = lax.broadcasted_iota(jnp.int32, (_CHUNK, n_cls), 1)

    def cand_mask(gtb, mgt):
        # get_gt_candidate_mask: anchor center strictly inside a valid gt box.
        x1g = gtb[:, 0:1]; y1g = gtb[:, 1:2]; x2g = gtb[:, 2:3]; y2g = gtb[:, 3:4]
        ltrb_min = jnp.minimum(jnp.minimum(ax - x1g, ay - y1g),
                               jnp.minimum(x2g - ax, y2g - ay))   # (CHUNK, hw)
        return (ltrb_min > _CAND_EPS) & (mgt != 0.0)

    # -------- class-score gather: one (O_pad,n_cls)x(n_cls,hw) MXU matmul -----
    # Result staged into ious_s; pass A reads the scores of chunk c before
    # overwriting that slot with the ious of chunk c (safe alias).
    oh_chunks = [(cls_iota == gt_cls_ref[0, c]).astype(f32) for c in range(n_chunks)]
    oh_all = oh_chunks[0] if n_chunks == 1 else jnp.concatenate(oh_chunks, axis=0)
    scores_all = jnp.dot(oh_all, sc, preferred_element_type=f32)  # (O_pad, hw)
    for c in range(n_chunks):
        ious_s[c] = scores_all[c * _CHUNK:(c + 1) * _CHUNK, :]

    # -------- pass A: per-gt-chunk metrics, top-k thresholds, dense stats -----
    def pass_a(c, carry):
        fg_part, iou_part, row_part, claim_part = carry           # (CHUNK, hw)
        gtb = gt_boxes_ref[0, c]           # (CHUNK, 4)
        mgt = mask_gt_ref[0, c]            # (CHUNK, 1) f32
        atg = atan_gt_ref[0, c]            # (CHUNK, 1) f32  arctan(w_gt / h_gt)
        x1g = gtb[:, 0:1]; y1g = gtb[:, 1:2]; x2g = gtb[:, 2:3]; y2g = gtb[:, 3:4]

        cand_b = cand_mask(gtb, mgt)

        scores = ious_s[c]                                        # staged gather
        if beta == 0.0:
            # only needed when ious**beta == 1 does not zero non-candidates
            scores = jnp.where(cand_b, scores, 0.0)

        # CIoU(gt, pd), clamped at 0
        w1 = x2g - x1g
        h1 = y2g - y1g + _IOU_EPS
        inter = (jnp.maximum(jnp.minimum(x2g, x2p) - jnp.maximum(x1g, x1p), 0.0) *
                 jnp.maximum(jnp.minimum(y2g, y2p) - jnp.maximum(y1g, y1p), 0.0))
        union = w1 * h1 + area2 - inter + _IOU_EPS
        iou = inter / union
        cw = jnp.maximum(x2g, x2p) - jnp.minimum(x1g, x1p)
        chh = jnp.maximum(y2g, y2p) - jnp.minimum(y1g, y1p)
        c2 = cw * cw + chh * chh + _IOU_EPS
        rho2 = ((sxp - x1g - x2g) ** 2 + (syp - y1g - y2g) ** 2) * 0.25
        v = (4.0 / (math.pi ** 2)) * (atp - atg) ** 2
        alpha_c = v / (v - iou + (1.0 + _IOU_EPS))
        ciou = iou - (rho2 / c2 + v * alpha_c)
        ious = jnp.where(cand_b, jnp.maximum(ciou, 0.0), 0.0)     # (CHUNK, hw)

        align = _static_pow(scores, alpha) * _static_pow(ious, beta)

        # top-k along anchors via k-th-largest threshold: 1 lane reduction/iter.
        # TODO(synk): on exact ties at the k-th metric value this selects all
        # tied anchors, while torch.topk keeps exactly topk (arbitrary subset);
        # semantics differ only on ties / when fewer than topk positive metrics.
        work = align.astype(wd)
        neg1 = jnp.asarray(-1.0, dtype=wd)
        kth = jnp.zeros((_CHUNK, 1), wd)
        for _ in range(topk):
            kth = jnp.max(work, axis=1, keepdims=True)
            work = jnp.where(work >= kth, neg1, work)
        claim_b = (align.astype(wd) >= kth) & cand_b

        align_s[c] = align
        ious_s[c] = ious
        kth_s[c] = kth.astype(f32)

        row_g = row_l + c * _CHUNK                                # global gt row

        # dense (CHUNK, hw) running per-anchor stats (reduced once after loop)
        fg_part = fg_part + claim_b.astype(f32)
        take = ious > iou_part                   # strict > keeps first occurrence
        row_part = jnp.where(take, row_g, row_part)
        iou_part = jnp.where(take, ious, iou_part)
        claim_part = jnp.minimum(claim_part, jnp.where(claim_b, row_g, O_pad))
        return fg_part, iou_part, row_part, claim_part

    carry0 = (jnp.zeros((_CHUNK, hw), f32),
              jnp.full((_CHUNK, hw), -1.0, f32),
              jnp.zeros((_CHUNK, hw), jnp.int32),
              jnp.full((_CHUNK, hw), O_pad, jnp.int32))
    fg_part, iou_part, row_part, claim_part = lax.fori_loop(0, n_chunks, pass_a,
                                                            carry0)

    # single cross-sublane reductions of the dense running stats
    fg_init = jnp.sum(fg_part, axis=0, keepdims=True)             # (1, hw)
    cmax = jnp.max(iou_part, axis=0, keepdims=True)
    amax_row = jnp.min(jnp.where(iou_part == cmax, row_part, O_pad),
                       axis=0, keepdims=True)                     # argmax(iou)
    first_claim = jnp.min(claim_part, axis=0, keepdims=True)

    # -------- select_highest_ious: resolve anchors claimed by multiple gts ----
    multi = fg_init > 1.0
    fg = jnp.where(multi, 1.0, fg_init)                           # (1, hw)
    tgt = jnp.where(multi, amax_row,
                    jnp.where(first_claim < O_pad, first_claim, 0))  # (1,hw) i32

    # -------- pass B: normalized align metric + target gather (MXU) -----------
    def pass_b(c, carry):
        norm_part, box_acc, cls_part = carry
        align = align_s[c]
        ious = ious_s[c]
        kth = kth_s[c]
        gtb = gt_boxes_ref[0, c]
        mgt = mask_gt_ref[0, c]
        gtc_f = gt_cls_ref[0, c].astype(f32)                      # (CHUNK, 1)
        row_g = row_l + c * _CHUNK

        # reconstruct the initial positive mask (replaces the maski_s scratch)
        cand_b = cand_mask(gtb, mgt)
        mask_i = ((align.astype(wd) >= kth.astype(wd)) & cand_b).astype(f32)
        is_max = (row_g == amax_row).astype(f32)
        mask_f = jnp.where(multi, is_max, mask_i)                 # final mask_pos

        am = align * mask_f
        pos_am = jnp.max(am, axis=1, keepdims=True)               # (CHUNK, 1)
        pos_iou = jnp.max(ious * mask_f, axis=1, keepdims=True)   # (CHUNK, 1)
        ratio = pos_iou / (pos_am + eps)
        norm_part = jnp.maximum(norm_part, am * ratio)            # dense (CHUNK,hw)

        # get_targets: gather per-anchor gt box / class via one-hot matmul
        oh_tgt = (row_g == tgt).astype(f32)                       # (CHUNK, hw)
        box_acc = box_acc + lax.dot_general(
            gtb, oh_tgt, dimension_numbers=(((0,), (0,)), ((), ())),
            preferred_element_type=f32)                           # (4, hw)
        cls_part = cls_part + gtc_f * oh_tgt                      # dense (CHUNK,hw)
        return norm_part, box_acc, cls_part

    norm_part, agt_boxes, cls_part = lax.fori_loop(
        0, n_chunks, pass_b,
        (jnp.zeros((_CHUNK, hw), f32), jnp.zeros((4, hw), f32),
         jnp.zeros((_CHUNK, hw), f32)))

    norm = jnp.max(norm_part, axis=0, keepdims=True)              # (1, hw)
    agt_cls_f = jnp.sum(cls_part, axis=0, keepdims=True)          # (1, hw)
    agt_cls = jnp.maximum(agt_cls_f, 0.0).astype(jnp.int32)       # clamp_(0)

    agt_boxes_ref[0] = agt_boxes
    agt_cls_ref[0] = agt_cls
    fg_ref[0] = fg
    tgt_ref[0] = tgt
    # fg-gated norm; the dense (n_cls, hw) one-hot-scaled scores are built in
    # the JAX wrapper (removes the largest in-kernel store term).
    norm_ref[0] = jnp.where(fg > 0.0, norm, 0.0)


class TaskAlignedAssigner:
    """JAX/Pallas port of the PyTorch TaskAlignedAssigner forward pass."""

    def __init__(self, topk: int = 13, n_cls: int = 80, alpha: float = 1.0,
                 beta: float = 6.0, eps: float = 1e-9,
                 use_bf16_topk: bool = False):
        # use_bf16_topk: run the top-k threshold loop in bf16. Recommended on
        # v6e / v7x (bf16 VPU); keep False on v5e or when exact f32 top-k
        # thresholds (tie behavior) must be preserved.
        self.topk = topk
        self.n_cls = n_cls
        self.bg_idx = n_cls
        self.alpha = alpha
        self.beta = beta
        self.eps = eps
        self.use_bf16_topk = use_bf16_topk

    @staticmethod
    def _vmem_budget(hw_pad, n_cls, n_chunks):
        """Computed VMEM request: scratch + 2x pipelined I/O blocks + staging."""
        f = 4
        O_pad = n_chunks * _CHUNK
        scratch = (2 * n_chunks * _CHUNK * hw_pad            # align_s, ious_s
                   + n_chunks * _CHUNK * _LANE) * f          # kth_s (lane-padded)
        gt_blocks = 4 * n_chunks * _CHUNK * _LANE            # 4 lane-padded gt inputs
        io = ((4 + n_cls + 2 + 1) * hw_pad + gt_blocks       # inputs
              + 8 * hw_pad) * f                              # outputs (4+1+1+1+1)
        temp = O_pad * hw_pad * f                            # scores_all staging
        total = scratch + 2 * io + temp + (8 << 20)          # Mosaic/spill headroom
        return int(min(max(total, 24 << 20), 100 << 20))

    def __call__(self, pd_boxes_xyxy, pd_cls_scores, gt_boxes_xyxy, gt_classes,
                 anchor_points, mask_gt):
        B, hw, n_cls = pd_cls_scores.shape
        O_max = gt_boxes_xyxy.shape[1]
        assert n_cls == self.n_cls
        f32 = jnp.float32

        if O_max == 0:
            # NOTE: replicates the PyTorch early-return ordering quirk
            # (classes, boxes, scores, fg, fg) of the reference module.
            bg = jnp.full((B, hw), float(self.bg_idx), f32)
            return (bg, jnp.zeros_like(pd_boxes_xyxy), jnp.zeros_like(pd_cls_scores),
                    jnp.zeros((B, hw), f32), jnp.zeros((B, hw), f32))

        # pad the gt axis to a multiple of the sublane chunk (padded rows have
        # mask_gt = 0 and contribute nothing).
        O_pad = ((O_max + _CHUNK - 1) // _CHUNK) * _CHUNK
        n_chunks = O_pad // _CHUNK
        opad = O_pad - O_max
        # pad the anchor axis to a multiple of 128 so every row is lane-dense;
        # padded anchors sit far outside every box (candidate mask false).
        hw_pad = ((hw + _LANE - 1) // _LANE) * _LANE
        hpad = hw_pad - hw

        gt_boxes = gt_boxes_xyxy.astype(f32)
        gt_cls_i = gt_classes.astype(jnp.int32)
        mask_gt_f = mask_gt.astype(f32)
        if opad:
            gt_boxes = jnp.pad(gt_boxes, ((0, 0), (0, opad), (0, 0)))
            gt_cls_i = jnp.pad(gt_cls_i, ((0, 0), (0, opad), (0, 0)))
            mask_gt_f = jnp.pad(mask_gt_f, ((0, 0), (0, opad), (0, 0)))

        pd_boxes = pd_boxes_xyxy.astype(f32)
        pd_scores = pd_cls_scores.astype(f32)
        anch = anchor_points.astype(f32)
        if hpad:
            pd_boxes = jnp.pad(pd_boxes, ((0, 0), (0, hpad), (0, 0)))
            pd_scores = jnp.pad(pd_scores, ((0, 0), (0, hpad), (0, 0)))
            anch = jnp.pad(anch, ((0, hpad), (0, 0)), constant_values=_FAR)

        # --- glue: transposes + per-box arctan terms (each depends on a single
        #     box only, so they are precomputed in the wrapper). --------------
        pd_boxes_t = jnp.transpose(pd_boxes, (0, 2, 1))            # (B,4,hw_pad)
        pd_scores_t = jnp.transpose(pd_scores, (0, 2, 1))          # (B,n_cls,hw_pad)
        anch_t = jnp.transpose(anch, (1, 0))                       # (2,hw_pad)
        atan_gt = jnp.arctan((gt_boxes[..., 2] - gt_boxes[..., 0]) /
                             (gt_boxes[..., 3] - gt_boxes[..., 1] + _IOU_EPS))[..., None]
        atan_pd = jnp.arctan((pd_boxes[..., 2] - pd_boxes[..., 0]) /
                             (pd_boxes[..., 3] - pd_boxes[..., 1] + _IOU_EPS)
                             )[:, None, :]                         # (B,1,hw_pad)

        gt_boxes_c = gt_boxes.reshape(B, n_chunks, _CHUNK, 4)
        gt_cls_c = gt_cls_i.reshape(B, n_chunks, _CHUNK, 1)
        mask_gt_c = mask_gt_f.reshape(B, n_chunks, _CHUNK, 1)
        atan_gt_c = atan_gt.reshape(B, n_chunks, _CHUNK, 1)

        topk_dtype = jnp.bfloat16 if self.use_bf16_topk else jnp.float32
        kernel = functools.partial(
            _tal_kernel, n_chunks=n_chunks, hw=hw_pad, n_cls=n_cls,
            topk=self.topk, alpha=self.alpha, beta=self.beta, eps=self.eps,
            topk_dtype=topk_dtype)

        out_shapes = (
            jax.ShapeDtypeStruct((B, 4, hw_pad), f32),        # agt boxes (transposed)
            jax.ShapeDtypeStruct((B, 1, hw_pad), jnp.int32),  # agt classes
            jax.ShapeDtypeStruct((B, 1, hw_pad), f32),        # fg mask (float)
            jax.ShapeDtypeStruct((B, 1, hw_pad), jnp.int32),  # target gt idx
            jax.ShapeDtypeStruct((B, 1, hw_pad), f32),        # fg-gated norm metric
        )
        grid_spec = pltpu.PrefetchScalarGridSpec(
            num_scalar_prefetch=0,
            grid=(B,),
            in_specs=[
                pl.BlockSpec((1, 4, hw_pad), lambda b: (b, 0, 0)),
                pl.BlockSpec((1, n_cls, hw_pad), lambda b: (b, 0, 0)),
                pl.BlockSpec((1, n_chunks, _CHUNK, 4), lambda b: (b, 0, 0, 0)),
                pl.BlockSpec((1, n_chunks, _CHUNK, 1), lambda b: (b, 0, 0, 0)),
                pl.BlockSpec((2, hw_pad), lambda b: (0, 0)),
                pl.BlockSpec((1, n_chunks, _CHUNK, 1), lambda b: (b, 0, 0, 0)),
                pl.BlockSpec((1, n_chunks, _CHUNK, 1), lambda b: (b, 0, 0, 0)),
                pl.BlockSpec((1, 1, hw_pad), lambda b: (b, 0, 0)),
            ],
            out_specs=[
                pl.BlockSpec((1, 4, hw_pad), lambda b: (b, 0, 0)),
                pl.BlockSpec((1, 1, hw_pad), lambda b: (b, 0, 0)),
                pl.BlockSpec((1, 1, hw_pad), lambda b: (b, 0, 0)),
                pl.BlockSpec((1, 1, hw_pad), lambda b: (b, 0, 0)),
                pl.BlockSpec((1, 1, hw_pad), lambda b: (b, 0, 0)),
            ],
            scratch_shapes=[
                pltpu.VMEM((n_chunks, _CHUNK, hw_pad), f32),   # align
                pltpu.VMEM((n_chunks, _CHUNK, hw_pad), f32),   # scores -> ious
                pltpu.VMEM((n_chunks, _CHUNK, 1), f32),        # k-th thresholds
            ],
        )

        agt_boxes_t, agt_cls, fg, tgt, norm = pl.pallas_call(
            kernel,
            out_shape=out_shapes,
            grid_spec=grid_spec,
            compiler_params=pltpu.CompilerParams(
                dimension_semantics=("parallel",),             # megacore on v7x
                vmem_limit_bytes=self._vmem_budget(hw_pad, n_cls, n_chunks)),
        )(pd_boxes_t, pd_scores_t, gt_boxes_c, gt_cls_c, anch_t, mask_gt_c,
          atan_gt_c, atan_pd)

        agt_boxes_xyxy = jnp.transpose(agt_boxes_t, (0, 2, 1))[:, :hw, :]  # (B,hw,4)
        agt_classes = agt_cls[:, 0, :hw]                                   # (B,hw)
        fg_mask = fg[:, 0, :hw] != 0                                       # (B,hw) bool
        target_gt_idx = tgt[:, 0, :hw]                                     # (B,hw)
        norm_g = norm[:, 0, :hw]                                           # (B,hw)

        # dense target scores built here (fuses into downstream loss):
        # scores[b,a,c] = norm_gated[b,a] if c == agt_classes[b,a] else 0
        cls_ids = jnp.arange(n_cls, dtype=jnp.int32)
        agt_cls_scores = jnp.where(
            agt_classes[..., None] == cls_ids[None, None, :],
            norm_g[..., None], 0.0)                                        # (B,hw,n_cls)

        return agt_boxes_xyxy, agt_classes, agt_cls_scores, fg_mask, target_gt_idx


if __name__ == "__main__":
    # Small, deterministic example shapes.  hw=208 (not a multiple of 128) and
    # O_max=12 (two gt chunks) exercise the padding + multi-chunk paths.
    B, O_max, n_cls, topk = 2, 12, 16, 4
    H, W = 16, 13
    hw = H * W  # 208 anchors

    key = jax.random.PRNGKey(0)
    k1, k2, k3, k4, k5, k6 = jax.random.split(key, 6)

    # anchor points (hw, 2): (x + 0.5, y + 0.5) feature-grid centers
    xs = jnp.arange(W, dtype=jnp.float32) + 0.5
    ys = jnp.arange(H, dtype=jnp.float32) + 0.5
    gx, gy = jnp.meshgrid(xs, ys)
    anchor_points = jnp.stack([gx.reshape(-1), gy.reshape(-1)], axis=-1)   # (hw, 2)

    # ground-truth boxes / classes / validity mask
    g_cxy = jax.random.uniform(k1, (B, O_max, 2), minval=3.0, maxval=12.0)
    g_wh = jax.random.uniform(k2, (B, O_max, 2), minval=2.0, maxval=6.0)
    gt_boxes_xyxy = jnp.concatenate([g_cxy - g_wh / 2, g_cxy + g_wh / 2], axis=-1)
    gt_classes = jax.random.randint(k3, (B, O_max, 1), 0, n_cls).astype(jnp.int32)
    n_valid = jnp.array([9, 4])
    mask_gt = (jnp.arange(O_max)[None, :] < n_valid[:, None]).astype(jnp.float32)[..., None]

    # predictions
    p_cxy = jax.random.uniform(k4, (B, hw, 2), minval=0.0, maxval=16.0)
    p_wh = jax.random.uniform(k5, (B, hw, 2), minval=1.0, maxval=8.0)
    pd_boxes_xyxy = jnp.concatenate([p_cxy - p_wh / 2, p_cxy + p_wh / 2], axis=-1)
    pd_cls_scores = jax.nn.sigmoid(jax.random.normal(k6, (B, hw, n_cls)))

    assigner = TaskAlignedAssigner(topk=topk, n_cls=n_cls, alpha=1.0, beta=6.0,
                                   eps=1e-9, use_bf16_topk=False)
    outs = assigner(pd_boxes_xyxy, pd_cls_scores, gt_boxes_xyxy, gt_classes,
                    anchor_points, mask_gt)
    for o in outs:
        jax.block_until_ready(o)
    print("KERNEL_OK")
</pallas_src>

<mosaic_0001>
module attributes {stable_mosaic.version = 11 : i64} {
  func.func @_tal_kernel(%arg0: i32, %arg1: memref<1x4x256xf32, #tpu.memory_space<vmem>>, %arg2: memref<1x16x256xf32, #tpu.memory_space<vmem>>, %arg3: memref<1x2x8x4xf32, #tpu.memory_space<vmem>>, %arg4: memref<1x2x8x1xi32, #tpu.memory_space<vmem>>, %arg5: memref<2x256xf32, #tpu.memory_space<vmem>>, %arg6: memref<1x2x8x1xf32, #tpu.memory_space<vmem>>, %arg7: memref<1x2x8x1xf32, #tpu.memory_space<vmem>>, %arg8: memref<1x1x256xf32, #tpu.memory_space<vmem>>, %arg9: memref<1x4x256xf32, #tpu.memory_space<vmem>>, %arg10: memref<1x1x256xi32, #tpu.memory_space<vmem>>, %arg11: memref<1x1x256xf32, #tpu.memory_space<vmem>>, %arg12: memref<1x1x256xi32, #tpu.memory_space<vmem>>, %arg13: memref<1x1x256xf32, #tpu.memory_space<vmem>>, %arg14: memref<2x8x256xf32, #tpu.memory_space<vmem>>, %arg15: memref<2x8x256xf32, #tpu.memory_space<vmem>>, %arg16: memref<2x8x1xf32, #tpu.memory_space<vmem>>) attributes {dimension_semantics = [#tpu.dimension_semantics<parallel>], iteration_bounds = array<i64: 2>, scalar_prefetch = 0 : i64, scratch_operands = 3 : i64, tpu.core_type = #tpu.core_type<tc>, window_params = [{transform_indices = @transform_0, window_bounds = array<i64: 1, 4, 256>}, {transform_indices = @transform_1, window_bounds = array<i64: 1, 16, 256>}, {transform_indices = @transform_2, window_bounds = array<i64: 1, 2, 8, 4>}, {transform_indices = @transform_3, window_bounds = array<i64: 1, 2, 8, 1>}, {pipeline_mode = #tpu.pipeline_mode<synchronous>, transform_indices = @transform_4, window_bounds = array<i64: 2, 256>}, {transform_indices = @transform_5, window_bounds = array<i64: 1, 2, 8, 1>}, {transform_indices = @transform_6, window_bounds = array<i64: 1, 2, 8, 1>}, {transform_indices = @transform_7, window_bounds = array<i64: 1, 1, 256>}, {transform_indices = @transform_8, window_bounds = array<i64: 1, 4, 256>}, {transform_indices = @transform_9, window_bounds = array<i64: 1, 1, 256>}, {transform_indices = @transform_10, window_bounds = array<i64: 1, 1, 256>}, {transform_indices = @transform_11, window_bounds = array<i64: 1, 1, 256>}, {transform_indices = @transform_12, window_bounds = array<i64: 1, 1, 256>}]} {
    %c0 = arith.constant 0 : index
    %c0_0 = arith.constant 0 : index
    %c0_1 = arith.constant 0 : index
    %0 = vector.load %arg1[%c0, %c0_0, %c0_1] : memref<1x4x256xf32, #tpu.memory_space<vmem>>, vector<1x4x256xf32>
    %1 = vector.shape_cast %0 : vector<1x4x256xf32> to vector<4x256xf32>
    %c0_2 = arith.constant 0 : index
    %c0_3 = arith.constant 0 : index
    %c0_4 = arith.constant 0 : index
    %2 = vector.load %arg2[%c0_2, %c0_3, %c0_4] : memref<1x16x256xf32, #tpu.memory_space<vmem>>, vector<1x16x256xf32>
    %3 = vector.shape_cast %2 : vector<1x16x256xf32> to vector<16x256xf32>
    %c0_5 = arith.constant 0 : index
    %c0_6 = arith.constant 0 : index
    %4 = vector.load %arg5[%c0_5, %c0_6] : memref<2x256xf32, #tpu.memory_space<vmem>>, vector<2x256xf32>
    %c0_7 = arith.constant 0 : index
    %c0_8 = arith.constant 0 : index
    %c0_9 = arith.constant 0 : index
    %5 = vector.load %arg8[%c0_7, %c0_8, %c0_9] : memref<1x1x256xf32, #tpu.memory_space<vmem>>, vector<1x1x256xf32>
    %6 = vector.shape_cast %5 : vector<1x1x256xf32> to vector<1x256xf32>
    %7 = vector.extract_strided_slice %1 {offsets = [0, 0], sizes = [1, 256], strides = [1, 1]} : vector<4x256xf32> to vector<1x256xf32>
    %8 = vector.extract_strided_slice %1 {offsets = [1, 0], sizes = [1, 256], strides = [1, 1]} : vector<4x256xf32> to vector<1x256xf32>
    %9 = vector.extract_strided_slice %1 {offsets = [2, 0], sizes = [1, 256], strides = [1, 1]} : vector<4x256xf32> to vector<1x256xf32>
    %10 = vector.extract_strided_slice %1 {offsets = [3, 0], sizes = [1, 256], strides = [1, 1]} : vector<4x256xf32> to vector<1x256xf32>
    %11 = vector.extract_strided_slice %4 {offsets = [0, 0], sizes = [1, 256], strides = [1, 1]} : vector<2x256xf32> to vector<1x256xf32>
    %12 = vector.extract_strided_slice %4 {offsets = [1, 0], sizes = [1, 256], strides = [1, 1]} : vector<2x256xf32> to vector<1x256xf32>
    %13 = arith.subf %9, %7 : vector<1x256xf32>
    %14 = arith.subf %10, %8 : vector<1x256xf32>
    %cst = arith.constant 1.000000e-07 : f32
    %15 = vector.broadcast %cst : f32 to vector<1x256xf32>
    %16 = arith.addf %14, %15 : vector<1x256xf32>
    %17 = arith.mulf %13, %16 : vector<1x256xf32>
    %18 = arith.addf %7, %9 : vector<1x256xf32>
    %19 = arith.addf %8, %10 : vector<1x256xf32>
    %20 = tpu.iota {dimensions = array<i32: 0>} : vector<8x256xi32>
    %21 = tpu.iota {dimensions = array<i32: 1>} : vector<8x16xi32>
    %c0_10 = arith.constant 0 : index
    %c0_11 = arith.constant 0 : index
    %c0_12 = arith.constant 0 : index
    %c0_13 = arith.constant 0 : index
    %22 = vector.load %arg4[%c0_10, %c0_11, %c0_12, %c0_13] : memref<1x2x8x1xi32, #tpu.memory_space<vmem>>, vector<1x1x8x1xi32>
    %23 = vector.shape_cast %22 : vector<1x1x8x1xi32> to vector<8x1xi32>
    %24 = vector.broadcast %23 : vector<8x1xi32> to vector<8x16xi32>
    %25 = arith.cmpi eq, %21, %24 : vector<8x16xi32>
    %26 = arith.extui %25 : vector<8x16xi1> to vector<8x16xi32>
    %27 = arith.sitofp %26 : vector<8x16xi32> to vector<8x16xf32>
    %c0_14 = arith.constant 0 : index
    %c1 = arith.constant 1 : index
    %c0_15 = arith.constant 0 : index
    %c0_16 = arith.constant 0 : index
    %28 = vector.load %arg4[%c0_14, %c1, %c0_15, %c0_16] : memref<1x2x8x1xi32, #tpu.memory_space<vmem>>, vector<1x1x8x1xi32>
    %29 = vector.shape_cast %28 : vector<1x1x8x1xi32> to vector<8x1xi32>
    %30 = vector.broadcast %29 : vector<8x1xi32> to vector<8x16xi32>
    %31 = arith.cmpi eq, %21, %30 : vector<8x16xi32>
    %32 = arith.extui %31 : vector<8x16xi1> to vector<8x16xi32>
    %33 = arith.sitofp %32 : vector<8x16xi32> to vector<8x16xf32>
    %34 = tpu.concatenate %27, %33 in 0 : vector<8x16xf32>, vector<8x16xf32> -> vector<16x16xf32>
    %cst_17 = arith.constant dense<0.000000e+00> : vector<16x256xf32>
    %35 = tpu.matmul %34, %3, %cst_17 {dimension_numbers = #tpu.dot_dimension_numbers<[1], [0], [0], [1], [0, 0, 1, 1], [], []>} : vector<16x16xf32>, vector<16x256xf32>, vector<16x256xf32> -> vector<16x256xf32>
    %36 = vector.extract_strided_slice %35 {offsets = [0, 0], sizes = [8, 256], strides = [1, 1]} : vector<16x256xf32> to vector<8x256xf32>
    %c0_18 = arith.constant 0 : index
    %c0_19 = arith.constant 0 : index
    %c0_20 = arith.constant 0 : index
    %37 = vector.load %arg15[%c0_18, %c0_19, %c0_20] : memref<2x8x256xf32, #tpu.memory_space<vmem>>, vector<1x8x256xf32>
    %38 = vector.shape_cast %37 : vector<1x8x256xf32> to vector<8x256xf32>
    %39 = vector.shape_cast %36 : vector<8x256xf32> to vector<1x8x256xf32>
    tpu.vector_store %arg15[%c0_18, %c0_19, %c0_20], %39 {strides = array<i32>} : memref<2x8x256xf32, #tpu.memory_space<vmem>>, vector<1x8x256xf32>,
    %40 = vector.extract_strided_slice %35 {offsets = [8, 0], sizes = [8, 256], strides = [1, 1]} : vector<16x256xf32> to vector<8x256xf32>
    %c1_21 = arith.constant 1 : index
    %c0_22 = arith.constant 0 : index
    %c0_23 = arith.constant 0 : index
    %41 = vector.load %arg15[%c1_21, %c0_22, %c0_23] : memref<2x8x256xf32, #tpu.memory_space<vmem>>, vector<1x8x256xf32>
    %42 = vector.shape_cast %41 : vector<1x8x256xf32> to vector<8x256xf32>
    %43 = vector.shape_cast %40 : vector<8x256xf32> to vector<1x8x256xf32>
    tpu.vector_store %arg15[%c1_21, %c0_22, %c0_23], %43 {strides = array<i32>} : memref<2x8x256xf32, #tpu.memory_space<vmem>>, vector<1x8x256xf32>,
    %cst_24 = arith.constant 0.000000e+00 : f32
    %44 = vector.broadcast %cst_24 : f32 to vector<8x256xf32>
    %cst_25 = arith.constant -1.000000e+00 : f32
    %45 = vector.broadcast %cst_25 : f32 to vector<8x256xf32>
    %c0_i32 = arith.constant 0 : i32
    %46 = vector.broadcast %c0_i32 : i32 to vector<8x256xi32>
    %c16_i32 = arith.constant 16 : i32
    %47 = vector.broadcast %c16_i32 : i32 to vector<8x256xi32>
    %c0_i32_26 = arith.constant 0 : i32
    %c2_i32 = arith.constant 2 : i32
    %48 = arith.addi %c0_i32_26, %c2_i32 : i32
    %c1_i32 = arith.constant 1 : i32
    %49:4 = scf.for %arg17 = %c0_i32_26 to %48 step %c1_i32 iter_args(%arg18 = %44, %arg19 = %45, %arg20 = %46, %arg21 = %47) -> (vector<8x256xf32>, vector<8x256xf32>, vector<8x256xi32>, vector<8x256xi32>)  : i32 {
      %c0_64 = arith.constant 0 : index
      %102 = arith.index_cast %arg17 : i32 to index
      %c0_65 = arith.constant 0 : index
      %c0_66 = arith.constant 0 : index
      %103 = vector.load %arg3[%c0_64, %102, %c0_65, %c0_66] : memref<1x2x8x4xf32, #tpu.memory_space<vmem>>, vector<1x1x8x4xf32>
      %104 = vector.shape_cast %103 : vector<1x1x8x4xf32> to vector<8x4xf32>
      %c0_67 = arith.constant 0 : index
      %105 = arith.index_cast %arg17 : i32 to index
      %c0_68 = arith.constant 0 : index
      %c0_69 = arith.constant 0 : index
      %106 = vector.load %arg6[%c0_67, %105, %c0_68, %c0_69] : memref<1x2x8x1xf32, #tpu.memory_space<vmem>>, vector<1x1x8x1xf32>
      %107 = vector.shape_cast %106 : vector<1x1x8x1xf32> to vector<8x1xf32>
      %c0_70 = arith.constant 0 : index
      %108 = arith.index_cast %arg17 : i32 to index
      %c0_71 = arith.constant 0 : index
      %c0_72 = arith.constant 0 : index
      %109 = vector.load %arg7[%c0_70, %108, %c0_71, %c0_72] : memref<1x2x8x1xf32, #tpu.memory_space<vmem>>, vector<1x1x8x1xf32>
      %110 = vector.shape_cast %109 : vector<1x1x8x1xf32> to vector<8x1xf32>
      %111 = vector.extract_strided_slice %104 {offsets = [0, 0], sizes = [8, 1], strides = [1, 1]} : vector<8x4xf32> to vector<8x1xf32>
      %112 = vector.extract_strided_slice %104 {offsets = [0, 1], sizes = [8, 1], strides = [1, 1]} : vector<8x4xf32> to vector<8x1xf32>
      %113 = vector.extract_strided_slice %104 {offsets = [0, 2], sizes = [8, 1], strides = [1, 1]} : vector<8x4xf32> to vector<8x1xf32>
      %114 = vector.extract_strided_slice %104 {offsets = [0, 3], sizes = [8, 1], strides = [1, 1]} : vector<8x4xf32> to vector<8x1xf32>
      %115 = vector.extract_strided_slice %104 {offsets = [0, 0], sizes = [8, 1], strides = [1, 1]} : vector<8x4xf32> to vector<8x1xf32>
      %116 = vector.extract_strided_slice %104 {offsets = [0, 1], sizes = [8, 1], strides = [1, 1]} : vector<8x4xf32> to vector<8x1xf32>
      %117 = vector.extract_strided_slice %104 {offsets = [0, 2], sizes = [8, 1], strides = [1, 1]} : vector<8x4xf32> to vector<8x1xf32>
      %118 = vector.extract_strided_slice %104 {offsets = [0, 3], sizes = [8, 1], strides = [1, 1]} : vector<8x4xf32> to vector<8x1xf32>
      %119 = vector.broadcast %11 : vector<1x256xf32> to vector<8x256xf32>
      %120 = vector.broadcast %115 : vector<8x1xf32> to vector<8x256xf32>
      %121 = arith.subf %119, %120 : vector<8x256xf32>
      %122 = vector.broadcast %12 : vector<1x256xf32> to vector<8x256xf32>
      %123 = vector.broadcast %116 : vector<8x1xf32> to vector<8x256xf32>
      %124 = arith.subf %122, %123 : vector<8x256xf32>
      %125 = arith.minimumf %121, %124 : vector<8x256xf32>
      %126 = vector.broadcast %117 : vector<8x1xf32> to vector<8x256xf32>
      %127 = vector.broadcast %11 : vector<1x256xf32> to vector<8x256xf32>
      %128 = arith.subf %126, %127 : vector<8x256xf32>
      %129 = vector.broadcast %118 : vector<8x1xf32> to vector<8x256xf32>
      %130 = vector.broadcast %12 : vector<1x256xf32> to vector<8x256xf32>
      %131 = arith.subf %129, %130 : vector<8x256xf32>
      %132 = arith.minimumf %128, %131 : vector<8x256xf32>
      %133 = arith.minimumf %125, %132 : vector<8x256xf32>
      %cst_73 = arith.constant 9.99999971E-10 : f32
      %134 = vector.broadcast %cst_73 : f32 to vector<8x256xf32>
      %135 = arith.cmpf ogt, %133, %134 : vector<8x256xf32>
      %cst_74 = arith.constant 0.000000e+00 : f32
      %136 = vector.broadcast %cst_74 : f32 to vector<8x1xf32>
      %137 = arith.cmpf one, %107, %136 : vector<8x1xf32>
      %138 = vector.broadcast %137 : vector<8x1xi1> to vector<8x256xi1>
      %139 = arith.andi %135, %138 : vector<8x256xi1>
      %140 = arith.index_cast %arg17 : i32 to index
      %c0_75 = arith.constant 0 : index
      %c0_76 = arith.constant 0 : index
      %141 = vector.load %arg15[%140, %c0_75, %c0_76] : memref<2x8x256xf32, #tpu.memory_space<vmem>>, vector<1x8x256xf32>
      %142 = vector.shape_cast %141 : vector<1x8x256xf32> to vector<8x256xf32>
      %143 = arith.subf %113, %111 : vector<8x1xf32>
      %144 = arith.subf %114, %112 : vector<8x1xf32>
      %cst_77 = arith.constant 1.000000e-07 : f32
      %145 = vector.broadcast %cst_77 : f32 to vector<8x1xf32>
      %146 = arith.addf %144, %145 : vector<8x1xf32>
      %147 = vector.broadcast %113 : vector<8x1xf32> to vector<8x256xf32>
      %148 = vector.broadcast %9 : vector<1x256xf32> to vector<8x256xf32>
      %149 = arith.minimumf %147, %148 : vector<8x256xf32>
      %150 = vector.broadcast %111 : vector<8x1xf32> to vector<8x256xf32>
      %151 = vector.broadcast %7 : vector<1x256xf32> to vector<8x256xf32>
      %152 = arith.maximumf %150, %151 : vector<8x256xf32>
      %153 = arith.subf %149, %152 : vector<8x256xf32>
      %cst_78 = arith.constant 0.000000e+00 : f32
      %154 = vector.broadcast %cst_78 : f32 to vector<8x256xf32>
      %155 = arith.maximumf %153, %154 : vector<8x256xf32>
      %156 = vector.broadcast %114 : vector<8x1xf32> to vector<8x256xf32>
      %157 = vector.broadcast %10 : vector<1x256xf32> to vector<8x256xf32>
      %158 = arith.minimumf %156, %157 : vector<8x256xf32>
      %159 = vector.broadcast %112 : vector<8x1xf32> to vector<8x256xf32>
      %160 = vector.broadcast %8 : vector<1x256xf32> to vector<8x256xf32>
      %161 = arith.maximumf %159, %160 : vector<8x256xf32>
      %162 = arith.subf %158, %161 : vector<8x256xf32>
      %cst_79 = arith.constant 0.000000e+00 : f32
      %163 = vector.broadcast %cst_79 : f32 to vector<8x256xf32>
      %164 = arith.maximumf %162, %163 : vector<8x256xf32>
      %165 = arith.mulf %155, %164 : vector<8x256xf32>
      %166 = arith.mulf %143, %146 : vector<8x1xf32>
      %167 = vector.broadcast %166 : vector<8x1xf32> to vector<8x256xf32>
      %168 = vector.broadcast %17 : vector<1x256xf32> to vector<8x256xf32>
      %169 = arith.addf %167, %168 : vector<8x256xf32>
      %170 = arith.subf %169, %165 : vector<8x256xf32>
      %cst_80 = arith.constant 1.000000e-07 : f32
      %171 = vector.broadcast %cst_80 : f32 to vector<8x256xf32>
      %172 = arith.addf %170, %171 : vector<8x256xf32>
      %173 = arith.divf %165, %172 : vector<8x256xf32>
      %174 = vector.broadcast %113 : vector<8x1xf32> to vector<8x256xf32>
      %175 = vector.broadcast %9 : vector<1x256xf32> to vector<8x256xf32>
      %176 = arith.maximumf %174, %175 : vector<8x256xf32>
      %177 = vector.broadcast %111 : vector<8x1xf32> to vector<8x256xf32>
      %178 = vector.broadcast %7 : vector<1x256xf32> to vector<8x256xf32>
      %179 = arith.minimumf %177, %178 : vector<8x256xf32>
      %180 = arith.subf %176, %179 : vector<8x256xf32>
      %181 = vector.broadcast %114 : vector<8x1xf32> to vector<8x256xf32>
      %182 = vector.broadcast %10 : vector<1x256xf32> to vector<8x256xf32>
      %183 = arith.maximumf %181, %182 : vector<8x256xf32>
      %184 = vector.broadcast %112 : vector<8x1xf32> to vector<8x256xf32>
      %185 = vector.broadcast %8 : vector<1x256xf32> to vector<8x256xf32>
      %186 = arith.minimumf %184, %185 : vector<8x256xf32>
      %187 = arith.subf %183, %186 : vector<8x256xf32>
      %188 = arith.mulf %180, %180 : vector<8x256xf32>
      %189 = arith.mulf %187, %187 : vector<8x256xf32>
      %190 = arith.addf %188, %189 : vector<8x256xf32>
      %cst_81 = arith.constant 1.000000e-07 : f32
      %191 = vector.broadcast %cst_81 : f32 to vector<8x256xf32>
      %192 = arith.addf %190, %191 : vector<8x256xf32>
      %193 = vector.broadcast %18 : vector<1x256xf32> to vector<8x256xf32>
      %194 = vector.broadcast %111 : vector<8x1xf32> to vector<8x256xf32>
      %195 = arith.subf %193, %194 : vector<8x256xf32>
      %196 = vector.broadcast %113 : vector<8x1xf32> to vector<8x256xf32>
      %197 = arith.subf %195, %196 : vector<8x256xf32>
      %198 = arith.mulf %197, %197 : vector<8x256xf32>
      %199 = vector.broadcast %19 : vector<1x256xf32> to vector<8x256xf32>
      %200 = vector.broadcast %112 : vector<8x1xf32> to vector<8x256xf32>
      %201 = arith.subf %199, %200 : vector<8x256xf32>
      %202 = vector.broadcast %114 : vector<8x1xf32> to vector<8x256xf32>
      %203 = arith.subf %201, %202 : vector<8x256xf32>
      %204 = arith.mulf %203, %203 : vector<8x256xf32>
      %205 = arith.addf %198, %204 : vector<8x256xf32>
      %cst_82 = arith.constant 2.500000e-01 : f32
      %206 = vector.broadcast %cst_82 : f32 to vector<8x256xf32>
      %207 = arith.mulf %205, %206 : vector<8x256xf32>
      %208 = vector.broadcast %6 : vector<1x256xf32> to vector<8x256xf32>
      %209 = vector.broadcast %110 : vector<8x1xf32> to vector<8x256xf32>
      %210 = arith.subf %208, %209 : vector<8x256xf32>
      %211 = arith.mulf %210, %210 : vector<8x256xf32>
      %cst_83 = arith.constant 0.405284733 : f32
      %212 = vector.broadcast %cst_83 : f32 to vector<8x256xf32>
      %213 = arith.mulf %212, %211 : vector<8x256xf32>
      %214 = arith.subf %213, %173 : vector<8x256xf32>
      %cst_84 = arith.constant 1.00000012 : f32
      %215 = vector.broadcast %cst_84 : f32 to vector<8x256xf32>
      %216 = arith.addf %214, %215 : vector<8x256xf32>
      %217 = arith.divf %213, %216 : vector<8x256xf32>
      %218 = arith.divf %207, %192 : vector<8x256xf32>
      %219 = arith.mulf %213, %217 : vector<8x256xf32>
      %220 = arith.addf %218, %219 : vector<8x256xf32>
      %221 = arith.subf %173, %220 : vector<8x256xf32>
      %cst_85 = arith.constant 0.000000e+00 : f32
      %222 = vector.broadcast %cst_85 : f32 to vector<8x256xf32>
      %223 = arith.maximumf %221, %222 : vector<8x256xf32>
      %cst_86 = arith.constant 0.000000e+00 : f32
      %224 = vector.broadcast %cst_86 : f32 to vector<8x256xf32>
      %225 = arith.select %139, %223, %224 : vector<8x256xi1>, vector<8x256xf32>
      %226 = arith.mulf %225, %225 : vector<8x256xf32>
      %227 = arith.mulf %226, %226 : vector<8x256xf32>
      %228 = arith.mulf %226, %227 : vector<8x256xf32>
      %229 = arith.mulf %142, %228 : vector<8x256xf32>
      %cst_87 = arith.constant dense<0xFF800000> : vector<8xf32>
      %230 = vector.multi_reduction <maximumf>, %229, %cst_87 [1] : vector<8x256xf32> to vector<8xf32>
      %231 = vector.shape_cast %230 : vector<8xf32> to vector<8x1xf32>
      %232 = vector.broadcast %231 : vector<8x1xf32> to vector<8x256xf32>
      %233 = arith.cmpf oge, %229, %232 : vector<8x256xf32>
      %cst_88 = arith.constant -1.000000e+00 : f32
      %234 = vector.broadcast %cst_88 : f32 to vector<8x256xf32>
      %235 = arith.select %233, %234, %229 : vector<8x256xi1>, vector<8x256xf32>
      %cst_89 = arith.constant dense<0xFF800000> : vector<8xf32>
      %236 = vector.multi_reduction <maximumf>, %235, %cst_89 [1] : vector<8x256xf32> to vector<8xf32>
      %237 = vector.shape_cast %236 : vector<8xf32> to vector<8x1xf32>
      %238 = vector.broadcast %237 : vector<8x1xf32> to vector<8x256xf32>
      %239 = arith.cmpf oge, %235, %238 : vector<8x256xf32>
      %cst_90 = arith.constant -1.000000e+00 : f32
      %240 = vector.broadcast %cst_90 : f32 to vector<8x256xf32>
      %241 = arith.select %239, %240, %235 : vector<8x256xi1>, vector<8x256xf32>
      %cst_91 = arith.constant dense<0xFF800000> : vector<8xf32>
      %242 = vector.multi_reduction <maximumf>, %241, %cst_91 [1] : vector<8x256xf32> to vector<8xf32>
      %243 = vector.shape_cast %242 : vector<8xf32> to vector<8x1xf32>
      %244 = vector.broadcast %243 : vector<8x1xf32> to vector<8x256xf32>
      %245 = arith.cmpf oge, %241, %244 : vector<8x256xf32>
      %cst_92 = arith.constant -1.000000e+00 : f32
      %246 = vector.broadcast %cst_92 : f32 to vector<8x256xf32>
      %247 = arith.select %245, %246, %241 : vector<8x256xi1>, vector<8x256xf32>
      %cst_93 = arith.constant dense<0xFF800000> : vector<8xf32>
      %248 = vector.multi_reduction <maximumf>, %247, %cst_93 [1] : vector<8x256xf32> to vector<8xf32>
      %249 = vector.shape_cast %248 : vector<8xf32> to vector<8x1xf32>
      %250 = vector.broadcast %249 : vector<8x1xf32> to vector<8x256xf32>
      %251 = arith.cmpf oge, %229, %250 : vector<8x256xf32>
      %252 = arith.andi %251, %139 : vector<8x256xi1>
      %253 = arith.index_cast %arg17 : i32 to index
      %c0_94 = arith.constant 0 : index
      %c0_95 = arith.constant 0 : index
      %254 = vector.load %arg14[%253, %c0_94, %c0_95] : memref<2x8x256xf32, #tpu.memory_space<vmem>>, vector<1x8x256xf32>
      %255 = vector.shape_cast %254 : vector<1x8x256xf32> to vector<8x256xf32>
      %256 = vector.shape_cast %229 : vector<8x256xf32> to vector<1x8x256xf32>
      tpu.vector_store %arg14[%253, %c0_94, %c0_95], %256 {strides = array<i32>} : memref<2x8x256xf32, #tpu.memory_space<vmem>>, vector<1x8x256xf32>,
      %257 = arith.index_cast %arg17 : i32 to index
      %c0_96 = arith.constant 0 : index
      %c0_97 = arith.constant 0 : index
      %258 = vector.load %arg15[%257, %c0_96, %c0_97] : memref<2x8x256xf32, #tpu.memory_space<vmem>>, vector<1x8x256xf32>
      %259 = vector.shape_cast %258 : vector<1x8x256xf32> to vector<8x256xf32>
      %260 = vector.shape_cast %225 : vector<8x256xf32> to vector<1x8x256xf32>
      tpu.vector_store %arg15[%257, %c0_96, %c0_97], %260 {strides = array<i32>} : memref<2x8x256xf32, #tpu.memory_space<vmem>>, vector<1x8x256xf32>,
      %261 = arith.index_cast %arg17 : i32 to index
      %c0_98 = arith.constant 0 : index
      %c0_99 = arith.constant 0 : index
      %262 = vector.load %arg16[%261, %c0_98, %c0_99] : memref<2x8x1xf32, #tpu.memory_space<vmem>>, vector<1x8x1xf32>
      %263 = vector.shape_cast %262 : vector<1x8x1xf32> to vector<8x1xf32>
      %264 = vector.shape_cast %249 : vector<8x1xf32> to vector<1x8x1xf32>
      tpu.vector_store %arg16[%261, %c0_98, %c0_99], %264 {strides = array<i32>} : memref<2x8x1xf32, #tpu.memory_space<vmem>>, vector<1x8x1xf32>,
      %c8_i32 = arith.constant 8 : i32
      %265 = arith.muli %arg17, %c8_i32 : i32
      %266 = vector.broadcast %265 : i32 to vector<8x256xi32>
      %267 = arith.addi %20, %266 : vector<8x256xi32>
      %268 = arith.extui %252 : vector<8x256xi1> to vector<8x256xi32>
      %269 = arith.sitofp %268 : vector<8x256xi32> to vector<8x256xf32>
      %270 = arith.addf %arg18, %269 : vector<8x256xf32>
      %271 = arith.cmpf ogt, %225, %arg19 : vector<8x256xf32>
      %272 = arith.select %271, %267, %arg20 : vector<8x256xi1>, vector<8x256xi32>
      %273 = arith.select %271, %225, %arg19 : vector<8x256xi1>, vector<8x256xf32>
      %c16_i32_100 = arith.constant 16 : i32
      %274 = vector.broadcast %c16_i32_100 : i32 to vector<8x256xi32>
      %275 = arith.select %252, %267, %274 : vector<8x256xi1>, vector<8x256xi32>
      %276 = arith.minsi %arg21, %275 : vector<8x256xi32>
      scf.yield %270, %273, %272, %276 : vector<8x256xf32>, vector<8x256xf32>, vector<8x256xi32>, vector<8x256xi32>
    }
    %c2_i32_27 = arith.constant 2 : i32
    %cst_28 = arith.constant dense<0.000000e+00> : vector<256xf32>
    %50 = vector.multi_reduction <add>, %49#0, %cst_28 [0] : vector<8x256xf32> to vector<256xf32>
    %51 = vector.shape_cast %50 : vector<256xf32> to vector<1x256xf32>
    %cst_29 = arith.constant dense<0xFF800000> : vector<256xf32>
    %52 = vector.multi_reduction <maximumf>, %49#1, %cst_29 [0] : vector<8x256xf32> to vector<256xf32>
    %53 = vector.shape_cast %52 : vector<256xf32> to vector<1x256xf32>
    %54 = vector.broadcast %53 : vector<1x256xf32> to vector<8x256xf32>
    %55 = arith.cmpf oeq, %49#1, %54 : vector<8x256xf32>
    %c16_i32_30 = arith.constant 16 : i32
    %56 = vector.broadcast %c16_i32_30 : i32 to vector<8x256xi32>
    %57 = arith.select %55, %49#2, %56 : vector<8x256xi1>, vector<8x256xi32>
    %cst_31 = arith.constant dense<2147483647> : vector<256xi32>
    %58 = vector.multi_reduction <minsi>, %57, %cst_31 [0] : vector<8x256xi32> to vector<256xi32>
    %59 = vector.shape_cast %58 : vector<256xi32> to vector<1x256xi32>
    %cst_32 = arith.constant dense<2147483647> : vector<256xi32>
    %60 = vector.multi_reduction <minsi>, %49#3, %cst_32 [0] : vector<8x256xi32> to vector<256xi32>
    %61 = vector.shape_cast %60 : vector<256xi32> to vector<1x256xi32>
    %cst_33 = arith.constant 1.000000e+00 : f32
    %62 = vector.broadcast %cst_33 : f32 to vector<1x256xf32>
    %63 = arith.cmpf ogt, %51, %62 : vector<1x256xf32>
    %cst_34 = arith.constant 1.000000e+00 : f32
    %64 = vector.broadcast %cst_34 : f32 to vector<1x256xf32>
    %65 = arith.select %63, %64, %51 : vector<1x256xi1>, vector<1x256xf32>
    %c16_i32_35 = arith.constant 16 : i32
    %66 = vector.broadcast %c16_i32_35 : i32 to vector<1x256xi32>
    %67 = arith.cmpi slt, %61, %66 : vector<1x256xi32>
    %c0_i32_36 = arith.constant 0 : i32
    %68 = vector.broadcast %c0_i32_36 : i32 to vector<1x256xi32>
    %69 = arith.select %67, %61, %68 : vector<1x256xi1>, vector<1x256xi32>
    %70 = arith.select %63, %59, %69 : vector<1x256xi1>, vector<1x256xi32>
    %cst_37 = arith.constant 0.000000e+00 : f32
    %71 = vector.broadcast %cst_37 : f32 to vector<8x256xf32>
    %cst_38 = arith.constant 0.000000e+00 : f32
    %72 = vector.broadcast %cst_38 : f32 to vector<4x256xf32>
    %cst_39 = arith.constant 0.000000e+00 : f32
    %73 = vector.broadcast %cst_39 : f32 to vector<8x256xf32>
    %c0_i32_40 = arith.constant 0 : i32
    %c2_i32_41 = arith.constant 2 : i32
    %74 = arith.addi %c0_i32_40, %c2_i32_41 : i32
    %c1_i32_42 = arith.constant 1 : i32
    %75:3 = scf.for %arg17 = %c0_i32_40 to %74 step %c1_i32_42 iter_args(%arg18 = %71, %arg19 = %72, %arg20 = %73) -> (vector<8x256xf32>, vector<4x256xf32>, vector<8x256xf32>)  : i32 {
      %102 = arith.index_cast %arg17 : i32 to index
      %c0_64 = arith.constant 0 : index
      %c0_65 = arith.constant 0 : index
      %103 = vector.load %arg14[%102, %c0_64, %c0_65] : memref<2x8x256xf32, #tpu.memory_space<vmem>>, vector<1x8x256xf32>
      %104 = vector.shape_cast %103 : vector<1x8x256xf32> to vector<8x256xf32>
      %105 = arith.index_cast %arg17 : i32 to index
      %c0_66 = arith.constant 0 : index
      %c0_67 = arith.constant 0 : index
      %106 = vector.load %arg15[%105, %c0_66, %c0_67] : memref<2x8x256xf32, #tpu.memory_space<vmem>>, vector<1x8x256xf32>
      %107 = vector.shape_cast %106 : vector<1x8x256xf32> to vector<8x256xf32>
      %108 = arith.index_cast %arg17 : i32 to index
      %c0_68 = arith.constant 0 : index
      %c0_69 = arith.constant 0 : index
      %109 = vector.load %arg16[%108, %c0_68, %c0_69] : memref<2x8x1xf32, #tpu.memory_space<vmem>>, vector<1x8x1xf32>
      %110 = vector.shape_cast %109 : vector<1x8x1xf32> to vector<8x1xf32>
      %c0_70 = arith.constant 0 : index
      %111 = arith.index_cast %arg17 : i32 to index
      %c0_71 = arith.constant 0 : index
      %c0_72 = arith.constant 0 : index
      %112 = vector.load %arg3[%c0_70, %111, %c0_71, %c0_72] : memref<1x2x8x4xf32, #tpu.memory_space<vmem>>, vector<1x1x8x4xf32>
      %113 = vector.shape_cast %112 : vector<1x1x8x4xf32> to vector<8x4xf32>
      %c0_73 = arith.constant 0 : index
      %114 = arith.index_cast %arg17 : i32 to index
      %c0_74 = arith.constant 0 : index
      %c0_75 = arith.constant 0 : index
      %115 = vector.load %arg6[%c0_73, %114, %c0_74, %c0_75] : memref<1x2x8x1xf32, #tpu.memory_space<vmem>>, vector<1x1x8x1xf32>
      %116 = vector.shape_cast %115 : vector<1x1x8x1xf32> to vector<8x1xf32>
      %c0_76 = arith.constant 0 : index
      %117 = arith.index_cast %arg17 : i32 to index
      %c0_77 = arith.constant 0 : index
      %c0_78 = arith.constant 0 : index
      %118 = vector.load %arg4[%c0_76, %117, %c0_77, %c0_78] : memref<1x2x8x1xi32, #tpu.memory_space<vmem>>, vector<1x1x8x1xi32>
      %119 = vector.shape_cast %118 : vector<1x1x8x1xi32> to vector<8x1xi32>
      %120 = arith.sitofp %119 : vector<8x1xi32> to vector<8x1xf32>
      %c8_i32 = arith.constant 8 : i32
      %121 = arith.muli %arg17, %c8_i32 : i32
      %122 = vector.broadcast %121 : i32 to vector<8x256xi32>
      %123 = arith.addi %20, %122 : vector<8x256xi32>
      %124 = vector.extract_strided_slice %113 {offsets = [0, 0], sizes = [8, 1], strides = [1, 1]} : vector<8x4xf32> to vector<8x1xf32>
      %125 = vector.extract_strided_slice %113 {offsets = [0, 1], sizes = [8, 1], strides = [1, 1]} : vector<8x4xf32> to vector<8x1xf32>
      %126 = vector.extract_strided_slice %113 {offsets = [0, 2], sizes = [8, 1], strides = [1, 1]} : vector<8x4xf32> to vector<8x1xf32>
      %127 = vector.extract_strided_slice %113 {offsets = [0, 3], sizes = [8, 1], strides = [1, 1]} : vector<8x4xf32> to vector<8x1xf32>
      %128 = vector.broadcast %11 : vector<1x256xf32> to vector<8x256xf32>
      %129 = vector.broadcast %124 : vector<8x1xf32> to vector<8x256xf32>
      %130 = arith.subf %128, %129 : vector<8x256xf32>
      %131 = vector.broadcast %12 : vector<1x256xf32> to vector<8x256xf32>
      %132 = vector.broadcast %125 : vector<8x1xf32> to vector<8x256xf32>
      %133 = arith.subf %131, %132 : vector<8x256xf32>
      %134 = arith.minimumf %130, %133 : vector<8x256xf32>
      %135 = vector.broadcast %126 : vector<8x1xf32> to vector<8x256xf32>
      %136 = vector.broadcast %11 : vector<1x256xf32> to vector<8x256xf32>
      %137 = arith.subf %135, %136 : vector<8x256xf32>
      %138 = vector.broadcast %127 : vector<8x1xf32> to vector<8x256xf32>
      %139 = vector.broadcast %12 : vector<1x256xf32> to vector<8x256xf32>
      %140 = arith.subf %138, %139 : vector<8x256xf32>
      %141 = arith.minimumf %137, %140 : vector<8x256xf32>
      %142 = arith.minimumf %134, %141 : vector<8x256xf32>
      %cst_79 = arith.constant 9.99999971E-10 : f32
      %143 = vector.broadcast %cst_79 : f32 to vector<8x256xf32>
      %144 = arith.cmpf ogt, %142, %143 : vector<8x256xf32>
      %cst_80 = arith.constant 0.000000e+00 : f32
      %145 = vector.broadcast %cst_80 : f32 to vector<8x1xf32>
      %146 = arith.cmpf one, %116, %145 : vector<8x1xf32>
      %147 = vector.broadcast %146 : vector<8x1xi1> to vector<8x256xi1>
      %148 = arith.andi %144, %147 : vector<8x256xi1>
      %149 = vector.broadcast %110 : vector<8x1xf32> to vector<8x256xf32>
      %150 = arith.cmpf oge, %104, %149 : vector<8x256xf32>
      %151 = arith.andi %150, %148 : vector<8x256xi1>
      %152 = arith.extui %151 : vector<8x256xi1> to vector<8x256xi32>
      %153 = arith.sitofp %152 : vector<8x256xi32> to vector<8x256xf32>
      %154 = vector.broadcast %59 : vector<1x256xi32> to vector<8x256xi32>
      %155 = arith.cmpi eq, %123, %154 : vector<8x256xi32>
      %156 = arith.extui %155 : vector<8x256xi1> to vector<8x256xi32>
      %157 = arith.sitofp %156 : vector<8x256xi32> to vector<8x256xf32>
      %158 = vector.shape_cast %63 : vector<1x256xi1> to vector<1x256xi1>
      %159 = vector.broadcast %158 : vector<1x256xi1> to vector<8x256xi1>
      %160 = arith.select %159, %157, %153 : vector<8x256xi1>, vector<8x256xf32>
      %161 = arith.mulf %104, %160 : vector<8x256xf32>
      %cst_81 = arith.constant dense<0xFF800000> : vector<8xf32>
      %162 = vector.multi_reduction <maximumf>, %161, %cst_81 [1] : vector<8x256xf32> to vector<8xf32>
      %163 = vector.shape_cast %162 : vector<8xf32> to vector<8x1xf32>
      %164 = arith.mulf %107, %160 : vector<8x256xf32>
      %cst_82 = arith.constant dense<0xFF800000> : vector<8xf32>
      %165 = vector.multi_reduction <maximumf>, %164, %cst_82 [1] : vector<8x256xf32> to vector<8xf32>
      %166 = vector.shape_cast %165 : vector<8xf32> to vector<8x1xf32>
      %cst_83 = arith.constant 9.99999971E-10 : f32
      %167 = vector.broadcast %cst_83 : f32 to vector<8x1xf32>
      %168 = arith.addf %163, %167 : vector<8x1xf32>
      %169 = arith.divf %166, %168 : vector<8x1xf32>
      %170 = vector.broadcast %169 : vector<8x1xf32> to vector<8x256xf32>
      %171 = arith.mulf %161, %170 : vector<8x256xf32>
      %172 = arith.maximumf %arg18, %171 : vector<8x256xf32>
      %173 = vector.broadcast %70 : vector<1x256xi32> to vector<8x256xi32>
      %174 = arith.cmpi eq, %123, %173 : vector<8x256xi32>
      %175 = arith.extui %174 : vector<8x256xi1> to vector<8x256xi32>
      %176 = arith.sitofp %175 : vector<8x256xi32> to vector<8x256xf32>
      %cst_84 = arith.constant dense<0.000000e+00> : vector<4x256xf32>
      %177 = tpu.matmul %113, %176, %cst_84 {dimension_numbers = #tpu.dot_dimension_numbers<[0], [0], [1], [1], [0, 1, 1, 1], [], []>} : vector<8x4xf32>, vector<8x256xf32>, vector<4x256xf32> -> vector<4x256xf32>
      %178 = arith.addf %arg19, %177 : vector<4x256xf32>
      %179 = vector.broadcast %120 : vector<8x1xf32> to vector<8x256xf32>
      %180 = arith.mulf %179, %176 : vector<8x256xf32>
      %181 = arith.addf %arg20, %180 : vector<8x256xf32>
      scf.yield %172, %178, %181 : vector<8x256xf32>, vector<4x256xf32>, vector<8x256xf32>
    }
    %c2_i32_43 = arith.constant 2 : i32
    %cst_44 = arith.constant dense<0xFF800000> : vector<256xf32>
    %76 = vector.multi_reduction <maximumf>, %75#0, %cst_44 [0] : vector<8x256xf32> to vector<256xf32>
    %77 = vector.shape_cast %76 : vector<256xf32> to vector<1x256xf32>
    %cst_45 = arith.constant dense<0.000000e+00> : vector<256xf32>
    %78 = vector.multi_reduction <add>, %75#2, %cst_45 [0] : vector<8x256xf32> to vector<256xf32>
    %79 = vector.shape_cast %78 : vector<256xf32> to vector<1x256xf32>
    %cst_46 = arith.constant 0.000000e+00 : f32
    %80 = vector.broadcast %cst_46 : f32 to vector<1x256xf32>
    %81 = arith.maximumf %79, %80 : vector<1x256xf32>
    %82 = arith.fptosi %81 : vector<1x256xf32> to vector<1x256xi32>
    %c0_47 = arith.constant 0 : index
    %c0_48 = arith.constant 0 : index
    %c0_49 = arith.constant 0 : index
    %83 = vector.load %arg9[%c0_47, %c0_48, %c0_49] : memref<1x4x256xf32, #tpu.memory_space<vmem>>, vector<1x4x256xf32>
    %84 = vector.shape_cast %83 : vector<1x4x256xf32> to vector<4x256xf32>
    %85 = vector.shape_cast %75#1 : vector<4x256xf32> to vector<1x4x256xf32>
    tpu.vector_store %arg9[%c0_47, %c0_48, %c0_49], %85 {strides = array<i32>} : memref<1x4x256xf32, #tpu.memory_space<vmem>>, vector<1x4x256xf32>,
    %c0_50 = arith.constant 0 : index
    %c0_51 = arith.constant 0 : index
    %c0_52 = arith.constant 0 : index
    %86 = vector.load %arg10[%c0_50, %c0_51, %c0_52] : memref<1x1x256xi32, #tpu.memory_space<vmem>>, vector<1x1x256xi32>
    %87 = vector.shape_cast %86 : vector<1x1x256xi32> to vector<1x256xi32>
    %88 = vector.shape_cast %82 : vector<1x256xi32> to vector<1x1x256xi32>
    tpu.vector_store %arg10[%c0_50, %c0_51, %c0_52], %88 {strides = array<i32>} : memref<1x1x256xi32, #tpu.memory_space<vmem>>, vector<1x1x256xi32>,
    %c0_53 = arith.constant 0 : index
    %c0_54 = arith.constant 0 : index
    %c0_55 = arith.constant 0 : index
    %89 = vector.load %arg11[%c0_53, %c0_54, %c0_55] : memref<1x1x256xf32, #tpu.memory_space<vmem>>, vector<1x1x256xf32>
    %90 = vector.shape_cast %89 : vector<1x1x256xf32> to vector<1x256xf32>
    %91 = vector.shape_cast %65 : vector<1x256xf32> to vector<1x1x256xf32>
    tpu.vector_store %arg11[%c0_53, %c0_54, %c0_55], %91 {strides = array<i32>} : memref<1x1x256xf32, #tpu.memory_space<vmem>>, vector<1x1x256xf32>,
    %c0_56 = arith.constant 0 : index
    %c0_57 = arith.constant 0 : index
    %c0_58 = arith.constant 0 : index
    %92 = vector.load %arg12[%c0_56, %c0_57, %c0_58] : memref<1x1x256xi32, #tpu.memory_space<vmem>>, vector<1x1x256xi32>
    %93 = vector.shape_cast %92 : vector<1x1x256xi32> to vector<1x256xi32>
    %94 = vector.shape_cast %70 : vector<1x256xi32> to vector<1x1x256xi32>
    tpu.vector_store %arg12[%c0_56, %c0_57, %c0_58], %94 {strides = array<i32>} : memref<1x1x256xi32, #tpu.memory_space<vmem>>, vector<1x1x256xi32>,
    %cst_59 = arith.constant 0.000000e+00 : f32
    %95 = vector.broadcast %cst_59 : f32 to vector<1x256xf32>
    %96 = arith.cmpf ogt, %65, %95 : vector<1x256xf32>
    %cst_60 = arith.constant 0.000000e+00 : f32
    %97 = vector.broadcast %cst_60 : f32 to vector<1x256xf32>
    %98 = arith.select %96, %77, %97 : vector<1x256xi1>, vector<1x256xf32>
    %c0_61 = arith.constant 0 : index
    %c0_62 = arith.constant 0 : index
    %c0_63 = arith.constant 0 : index
    %99 = vector.load %arg13[%c0_61, %c0_62, %c0_63] : memref<1x1x256xf32, #tpu.memory_space<vmem>>, vector<1x1x256xf32>
    %100 = vector.shape_cast %99 : vector<1x1x256xf32> to vector<1x256xf32>
    %101 = vector.shape_cast %98 : vector<1x256xf32> to vector<1x1x256xf32>
    tpu.vector_store %arg13[%c0_61, %c0_62, %c0_63], %101 {strides = array<i32>} : memref<1x1x256xf32, #tpu.memory_space<vmem>>, vector<1x1x256xf32>,
    return
  }
  func.func @transform_0(%arg0: i32) -> (i32, i32, i32) {
    %c0_i32 = arith.constant 0 : i32
    %c0_i32_0 = arith.constant 0 : i32
    %c0_i32_1 = arith.constant 0 : i32
    return %arg0, %c0_i32, %c0_i32_0 : i32, i32, i32
  }
  func.func @transform_1(%arg0: i32) -> (i32, i32, i32) {
    %c0_i32 = arith.constant 0 : i32
    %c0_i32_0 = arith.constant 0 : i32
    %c0_i32_1 = arith.constant 0 : i32
    return %arg0, %c0_i32, %c0_i32_0 : i32, i32, i32
  }
  func.func @transform_2(%arg0: i32) -> (i32, i32, i32, i32) {
    %c0_i32 = arith.constant 0 : i32
    %c0_i32_0 = arith.constant 0 : i32
    %c0_i32_1 = arith.constant 0 : i32
    %c0_i32_2 = arith.constant 0 : i32
    return %arg0, %c0_i32, %c0_i32_0, %c0_i32_1 : i32, i32, i32, i32
  }
  func.func @transform_3(%arg0: i32) -> (i32, i32, i32, i32) {
    %c0_i32 = arith.constant 0 : i32
    %c0_i32_0 = arith.constant 0 : i32
    %c0_i32_1 = arith.constant 0 : i32
    %c0_i32_2 = arith.constant 0 : i32
    return %arg0, %c0_i32, %c0_i32_0, %c0_i32_1 : i32, i32, i32, i32
  }
  func.func @transform_4(%arg0: i32) -> (i32, i32) {
    %c0_i32 = arith.constant 0 : i32
    %c0_i32_0 = arith.constant 0 : i32
    %c0_i32_1 = arith.constant 0 : i32
    return %c0_i32, %c0_i32_0 : i32, i32
  }
  func.func @transform_5(%arg0: i32) -> (i32, i32, i32, i32) {
    %c0_i32 = arith.constant 0 : i32
    %c0_i32_0 = arith.constant 0 : i32
    %c0_i32_1 = arith.constant 0 : i32
    %c0_i32_2 = arith.constant 0 : i32
    return %arg0, %c0_i32, %c0_i32_0, %c0_i32_1 : i32, i32, i32, i32
  }
  func.func @transform_6(%arg0: i32) -> (i32, i32, i32, i32) {
    %c0_i32 = arith.constant 0 : i32
    %c0_i32_0 = arith.constant 0 : i32
    %c0_i32_1 = arith.constant 0 : i32
    %c0_i32_2 = arith.constant 0 : i32
    return %arg0, %c0_i32, %c0_i32_0, %c0_i32_1 : i32, i32, i32, i32
  }
  func.func @transform_7(%arg0: i32) -> (i32, i32, i32) {
    %c0_i32 = arith.constant 0 : i32
    %c0_i32_0 = arith.constant 0 : i32
    %c0_i32_1 = arith.constant 0 : i32
    return %arg0, %c0_i32, %c0_i32_0 : i32, i32, i32
  }
  func.func @transform_8(%arg0: i32) -> (i32, i32, i32) {
    %c0_i32 = arith.constant 0 : i32
    %c0_i32_0 = arith.constant 0 : i32
    %c0_i32_1 = arith.constant 0 : i32
    return %arg0, %c0_i32, %c0_i32_0 : i32, i32, i32
  }
  func.func @transform_9(%arg0: i32) -> (i32, i32, i32) {
    %c0_i32 = arith.constant 0 : i32
    %c0_i32_0 = arith.constant 0 : i32
    %c0_i32_1 = arith.constant 0 : i32
    return %arg0, %c0_i32, %c0_i32_0 : i32, i32, i32
  }
  func.func @transform_10(%arg0: i32) -> (i32, i32, i32) {
    %c0_i32 = arith.constant 0 : i32
    %c0_i32_0 = arith.constant 0 : i32
    %c0_i32_1 = arith.constant 0 : i32
    return %arg0, %c0_i32, %c0_i32_0 : i32, i32, i32
  }
  func.func @transform_11(%arg0: i32) -> (i32, i32, i32) {
    %c0_i32 = arith.constant 0 : i32
    %c0_i32_0 = arith.constant 0 : i32
    %c0_i32_1 = arith.constant 0 : i32
    return %arg0, %c0_i32, %c0_i32_0 : i32, i32, i32
  }
  func.func @transform_12(%arg0: i32) -> (i32, i32, i32) {
    %c0_i32 = arith.constant 0 : i32
    %c0_i32_0 = arith.constant 0 : i32
    %c0_i32_1 = arith.constant 0 : i32
    return %arg0, %c0_i32, %c0_i32_0 : i32, i32, i32
  }
}

</mosaic_0001>

<llo_original>
// kernel: tpu_custom_call.1
$region0: #{tpu_custom_call.1}
  #allocation0 [shape = 'u32[]', space=smem, size = 0x4, offset = 0x4, fixed_abs, tag = 'smem constant byte address 0x4 - core index']
  #allocation1 [shape = 'u32[144,128]{1,0:T(1,128)}', space=vmem, size = 0x12000, scoped, tag = 'internal scratch']
  #allocation2 [shape = 'f32[2,8,256]{2,1,0:T(8,128)}', space=vmem, size = 0x4000, scoped, tag = 'scratch operand']
  #allocation3 [shape = 'f32[2,8,256]{2,1,0:T(8,128)}', space=vmem, size = 0x4000, scoped, tag = 'scratch operand']
  #allocation4 [shape = 'f32[2,8,1]{2,1,0:T(8,128)}', space=vmem, size = 0x2000, scoped, tag = 'scratch operand']
  %s0 = inlined_call_operand.vmem [shape: f32[2,4,256], index: 0, kind: input, shape index: {}]
  %s1 = inlined_call_operand.vmem [shape: f32[2,16,256], index: 1, kind: input, shape index: {}]
  %s2 = inlined_call_operand.vmem [shape: f32[2,2,8,4], index: 2, kind: input, shape index: {}]
  %s3 = inlined_call_operand.vmem [shape: s32[2,2,8,1], index: 3, kind: input, shape index: {}]
  %s4 = inlined_call_operand.vmem [shape: f32[2,256], index: 4, kind: input, shape index: {}]
  %s5 = inlined_call_operand.vmem [shape: f32[2,2,8,1], index: 5, kind: input, shape index: {}]
  %s6 = inlined_call_operand.vmem [shape: f32[2,2,8,1], index: 6, kind: input, shape index: {}]
  %s7 = inlined_call_operand.vmem [shape: f32[2,1,256], index: 7, kind: input, shape index: {}]
  %s8 = inlined_call_operand.hbm [shape: f32[2,4,256], index: 8, kind: output, shape index: {0}]
  %s9 = inlined_call_operand.hbm [shape: s32[2,1,256], index: 9, kind: output, shape index: {1}]
  %s10 = inlined_call_operand.hbm [shape: f32[2,1,256], index: 10, kind: output, shape index: {2}]
  %s11 = inlined_call_operand.hbm [shape: s32[2,1,256], index: 11, kind: output, shape index: {3}]
  %s12 = inlined_call_operand.hbm [shape: f32[2,1,256], index: 12, kind: output, shape index: {4}]
  %13 = xla_tuple %s8, %s9, %s10, %s11, %s12
  %s14 = sld [smem:[#allocation0]]
  $region111: #{tpu_custom_call.1} parent=0
    _
  %s16 = ssub.s32 1, %s14
  %s17 = scalar_select 0, %s16, %s14
  $region1: #{tpu_custom_call.1} parent=0
    #allocation5 [shape = 'u8[8192]{0}', space=vmem, size = 0x2000, scoped, tag = 'output window, operand 0']
    #allocation6 [shape = 's32[2]{0}', space=sflag, size = 0x8, scoped, tag = 'scoped memory for tpu_custom_call.1']
    #allocation7 [shape = 'u8[2048]{0}', space=vmem, size = 0x800, scoped, tag = 'output window, operand 1']
    #allocation8 [shape = 's32[2]{0}', space=sflag, size = 0x8, scoped, tag = 'scoped memory for tpu_custom_call.1']
    #allocation9 [shape = 'u8[2048]{0}', space=vmem, size = 0x800, scoped, tag = 'output window, operand 2']
    #allocation10 [shape = 'u8[2048]{0}', space=vmem, size = 0x800, scoped, tag = 'output window, operand 3']
    #allocation11 [shape = 's32[2]{0}', space=sflag, size = 0x8, scoped, tag = 'scoped memory for tpu_custom_call.1']
    #allocation12 [shape = 'u8[2048]{0}', space=vmem, size = 0x800, scoped, tag = 'output window, operand 4']
    %18 = vsyncpa [#allocation6], 0
    %s19 = scalar_lea.sflag [#allocation6], 1
    %20 = vsyncpa %s19, 0
    %21 = vsyncpa [#allocation8], 0
    %s22 = scalar_lea.sflag [#allocation8], 1
    %23 = vsyncpa %s22, 0
    %24 = vsyncpa [#allocation11], 0
    %s25 = scalar_lea.sflag [#allocation11], 1
    %26 = vsyncpa %s25, 0
    loop: start=0, step=1, limit=4
    $region2: #{tpu_custom_call.1} parent=1 // loop_pre_header
      _
    $region3: #{tpu_custom_call.1} parent=1 // loop_header
      %s28 = sphi 0, %s32
      %p29 = scmp.ge.s32.totalorder %s28, 4
      %s38 = sphi 0, %s40
      %s41 = sphi 0, %s38
      %s42 = sphi 0, %s41
      %s58 = sphi 0, %s42
      %s64 = sphi 0, %s66
      %s67 = sphi 0, %s64
      %s68 = sphi 0, %s67
      %s84 = sphi 0, %s68
      %s90 = sphi 0, %s92
      %s93 = sphi 0, %s90
      %s94 = sphi 0, %s93
      %s110 = sphi 0, %s94
      %s116 = sphi 0, %s118
      %s119 = sphi 0, %s116
      %s120 = sphi 0, %s119
      %s136 = sphi 0, %s120
      %s140 = sphi 0, %s140
      %s142 = sphi 0, %s140
      %s143 = sphi 0, %s142
      %s157 = sphi 0, %s143
      %s163 = sphi 0, %s165
      %s166 = sphi 0, %s163
      %s167 = sphi 0, %s166
      %s183 = sphi 0, %s167
      %s189 = sphi 0, %s191
      %s192 = sphi 0, %s189
      %s193 = sphi 0, %s192
      %s209 = sphi 0, %s193
      %s215 = sphi 0, %s217
      %s218 = sphi 0, %s215
      %s219 = sphi 0, %s218
      %s235 = sphi 0, %s219
      %s241 = sphi 0, %s243
      %s244 = sphi 0, %s241
      %s245 = sphi 0, %s244
      %s261 = sphi 0, %s245
      %s267 = sphi 0, %s269
      %s270 = sphi 0, %s267
      %s271 = sphi 0, %s270
      %s287 = sphi 0, %s271
      %s293 = sphi 0, %s295
      %s296 = sphi 0, %s293
      %s297 = sphi 0, %s296
      %s313 = sphi 0, %s297
      %s319 = sphi 0, %s321
      %s322 = sphi 0, %s319
      %s323 = sphi 0, %s322
      %s339 = sphi 0, %s323
      %s345 = sphi 0, %s347
      %s348 = sphi 0, %s345
      %s349 = sphi 0, %s348
      %s365 = sphi 0, %s349
    $region4: #{tpu_custom_call.1} parent=1 // loop_header_branch
      %31 = sbr.rel (%p29) target = $region8
    $region5: #{tpu_custom_call.1} parent=1 // loop_body
      %s33 = ssub.s32 %s28, 1
      %s34 = ssub.s32 %s28, 2
      %s35 = sadd.s32 %s28, 1
      %s36 = ssub.s32 %s28, %s35
      %p37 = scmp.eq.s32.totalorder %s36, 0
      %s39 = sadd.s32 %s38, 1
      %s40 = scalar_select %p37, %s38, %s39
      %p43 = pneg %p37
      %p44 = scmp.eq.s32.totalorder %s28, 1
      %p45 = por %p43, %p44
      %p46 = scmp.ne.s32.totalorder %s38, %s41
      %p47 = scmp.eq.s32.totalorder %s28, 0
      %p48 = por %p46, %p47
      %p49 = scmp.ne.s32.totalorder %s38, %s41
      %p50 = scmp.eq.s32.totalorder %s33, 1
      %p51 = por %p49, %p50
      %p52 = scmp.ne.s32.totalorder %s41, %s42
      %p53 = scmp.eq.s32.totalorder %s33, 0
      %p54 = por %p52, %p53
      %p55 = scmp.ne.s32.totalorder %s41, %s42
      %p56 = scmp.eq.s32.totalorder %s34, 1
      %p57 = por %p55, %p56
      %p59 = scmp.ne.s32.totalorder %s42, %s58
      %p60 = scmp.eq.s32.totalorder %s34, 0
      %p61 = por %p59, %p60
      %s62 = ssub.s32 %s28, %s35
      %p63 = scmp.eq.s32.totalorder %s62, 0
      %s65 = sadd.s32 %s64, 1
      %s66 = scalar_select %p63, %s64, %s65
      %p69 = pneg %p63
      %p70 = scmp.eq.s32.totalorder %s28, 1
      %p71 = por %p69, %p70
      %p72 = scmp.ne.s32.totalorder %s64, %s67
      %p73 = scmp.eq.s32.totalorder %s28, 0
      %p74 = por %p72, %p73
      %p75 = scmp.ne.s32.totalorder %s64, %s67
      %p76 = scmp.eq.s32.totalorder %s33, 1
      %p77 = por %p75, %p76
      %p78 = scmp.ne.s32.totalorder %s67, %s68
      %p79 = scmp.eq.s32.totalorder %s33, 0
      %p80 = por %p78, %p79
      %p81 = scmp.ne.s32.totalorder %s67, %s68
      %p82 = scmp.eq.s32.totalorder %s34, 1
      %p83 = por %p81, %p82
      %p85 = scmp.ne.s32.totalorder %s68, %s84
      %p86 = scmp.eq.s32.totalorder %s34, 0
      %p87 = por %p85, %p86
      %s88 = ssub.s32 %s28, %s35
      %p89 = scmp.eq.s32.totalorder %s88, 0
      %s91 = sadd.s32 %s90, 1
      %s92 = scalar_select %p89, %s90, %s91
      %p95 = pneg %p89
      %p96 = scmp.eq.s32.totalorder %s28, 1
      %p97 = por %p95, %p96
      %p98 = scmp.ne.s32.totalorder %s90, %s93
      %p99 = scmp.eq.s32.totalorder %s28, 0
      %p100 = por %p98, %p99
      %p101 = scmp.ne.s32.totalorder %s90, %s93
      %p102 = scmp.eq.s32.totalorder %s33, 1
      %p103 = por %p101, %p102
      %p104 = scmp.ne.s32.totalorder %s93, %s94
      %p105 = scmp.eq.s32.totalorder %s33, 0
      %p106 = por %p104, %p105
      %p107 = scmp.ne.s32.totalorder %s93, %s94
      %p108 = scmp.eq.s32.totalorder %s34, 1
      %p109 = por %p107, %p108
      %p111 = scmp.ne.s32.totalorder %s94, %s110
      %p112 = scmp.eq.s32.totalorder %s34, 0
      %p113 = por %p111, %p112
      %s114 = ssub.s32 %s28, %s35
      %p115 = scmp.eq.s32.totalorder %s114, 0
      %s117 = sadd.s32 %s116, 1
      %s118 = scalar_select %p115, %s116, %s117
      %p121 = pneg %p115
      %p122 = scmp.eq.s32.totalorder %s28, 1
      %p123 = por %p121, %p122
      %p124 = scmp.ne.s32.totalorder %s116, %s119
      %p125 = scmp.eq.s32.totalorder %s28, 0
      %p126 = por %p124, %p125
      %p127 = scmp.ne.s32.totalorder %s116, %s119
      %p128 = scmp.eq.s32.totalorder %s33, 1
      %p129 = por %p127, %p128
      %p130 = scmp.ne.s32.totalorder %s119, %s120
      %p131 = scmp.eq.s32.totalorder %s33, 0
      %p132 = por %p130, %p131
      %p133 = scmp.ne.s32.totalorder %s119, %s120
      %p134 = scmp.eq.s32.totalorder %s34, 1
      %p135 = por %p133, %p134
      %p137 = scmp.ne.s32.totalorder %s120, %s136
      %p138 = scmp.eq.s32.totalorder %s34, 0
      %p139 = por %p137, %p138
      %s141 = sadd.s32 %s140, 1
      %p144 = scmp.eq.s32.totalorder %s28, 1
      %p145 = scmp.ne.s32.totalorder %s140, %s142
      %p146 = scmp.eq.s32.totalorder %s28, 0
      %p147 = por %p145, %p146
      %p148 = scmp.ne.s32.totalorder %s140, %s142
      %p149 = scmp.eq.s32.totalorder %s33, 1
      %p150 = por %p148, %p149
      %p151 = scmp.ne.s32.totalorder %s142, %s143
      %p152 = scmp.eq.s32.totalorder %s33, 0
      %p153 = por %p151, %p152
      %p154 = scmp.ne.s32.totalorder %s142, %s143
      %p155 = scmp.eq.s32.totalorder %s34, 1
      %p156 = por %p154, %p155
      %p158 = scmp.ne.s32.totalorder %s143, %s157
      %p159 = scmp.eq.s32.totalorder %s34, 0
      %p160 = por %p158, %p159
      %s161 = ssub.s32 %s28, %s35
      %p162 = scmp.eq.s32.totalorder %s161, 0
      %s164 = sadd.s32 %s163, 1
      %s165 = scalar_select %p162, %s163, %s164
      %p168 = pneg %p162
      %p169 = scmp.eq.s32.totalorder %s28, 1
      %p170 = por %p168, %p169
      %p171 = scmp.ne.s32.totalorder %s163, %s166
      %p172 = scmp.eq.s32.totalorder %s28, 0
      %p173 = por %p171, %p172
      %p174 = scmp.ne.s32.totalorder %s163, %s166
      %p175 = scmp.eq.s32.totalorder %s33, 1
      %p176 = por %p174, %p175
      %p177 = scmp.ne.s32.totalorder %s166, %s167
      %p178 = scmp.eq.s32.totalorder %s33, 0
      %p179 = por %p177, %p178
      %p180 = scmp.ne.s32.totalorder %s166, %s167
      %p181 = scmp.eq.s32.totalorder %s34, 1
      %p182 = por %p180, %p181
      %p184 = scmp.ne.s32.totalorder %s167, %s183
      %p185 = scmp.eq.s32.totalorder %s34, 0
      %p186 = por %p184, %p185
      %s187 = ssub.s32 %s28, %s35
      %p188 = scmp.eq.s32.totalorder %s187, 0
      %s190 = sadd.s32 %s189, 1
      %s191 = scalar_select %p188, %s189, %s190
      %p194 = pneg %p188
      %p195 = scmp.eq.s32.totalorder %s28, 1
      %p196 = por %p194, %p195
      %p197 = scmp.ne.s32.totalorder %s189, %s192
      %p198 = scmp.eq.s32.totalorder %s28, 0
      %p199 = por %p197, %p198
      %p200 = scmp.ne.s32.totalorder %s189, %s192
      %p201 = scmp.eq.s32.totalorder %s33, 1
      %p202 = por %p200, %p201
      %p203 = scmp.ne.s32.totalorder %s192, %s193
      %p204 = scmp.eq.s32.totalorder %s33, 0
      %p205 = por %p203, %p204
      %p206 = scmp.ne.s32.totalorder %s192, %s193
      %p207 = scmp.eq.s32.totalorder %s34, 1
      %p208 = por %p206, %p207
      %p210 = scmp.ne.s32.totalorder %s193, %s209
      %p211 = scmp.eq.s32.totalorder %s34, 0
      %p212 = por %p210, %p211
      %s213 = ssub.s32 %s28, %s35
      %p214 = scmp.eq.s32.totalorder %s213, 0
      %s216 = sadd.s32 %s215, 1
      %s217 = scalar_select %p214, %s215, %s216
      %p220 = pneg %p214
      %p221 = scmp.eq.s32.totalorder %s28, 1
      %p222 = por %p220, %p221
      %p223 = scmp.ne.s32.totalorder %s215, %s218
      %p224 = scmp.eq.s32.totalorder %s28, 0
      %p225 = por %p223, %p224
      %p226 = scmp.ne.s32.totalorder %s215, %s218
      %p227 = scmp.eq.s32.totalorder %s33, 1
      %p228 = por %p226, %p227
      %p229 = scmp.ne.s32.totalorder %s218, %s219
      %p230 = scmp.eq.s32.totalorder %s33, 0
      %p231 = por %p229, %p230
      %p232 = scmp.ne.s32.totalorder %s218, %s219
      %p233 = scmp.eq.s32.totalorder %s34, 1
      %p234 = por %p232, %p233
      %p236 = scmp.ne.s32.totalorder %s219, %s235
      %p237 = scmp.eq.s32.totalorder %s34, 0
      %p238 = por %p236, %p237
      %s239 = ssub.s32 %s28, %s35
      %p240 = scmp.eq.s32.totalorder %s239, 0
      %s242 = sadd.s32 %s241, 1
      %s243 = scalar_select %p240, %s241, %s242
      %p246 = pneg %p240
      %p247 = scmp.eq.s32.totalorder %s28, 1
      %p248 = por %p246, %p247
      %p249 = scmp.ne.s32.totalorder %s241, %s244
      %p250 = scmp.eq.s32.totalorder %s28, 0
      %p251 = por %p249, %p250
      %p252 = scmp.ne.s32.totalorder %s241, %s244
      %p253 = scmp.eq.s32.totalorder %s33, 1
      %p254 = por %p252, %p253
      %p255 = scmp.ne.s32.totalorder %s244, %s245
      %p256 = scmp.eq.s32.totalorder %s33, 0
      %p257 = por %p255, %p256
      %p258 = scmp.ne.s32.totalorder %s244, %s245
      %p259 = scmp.eq.s32.totalorder %s34, 1
      %p260 = por %p258, %p259
      %p262 = scmp.ne.s32.totalorder %s245, %s261
      %p263 = scmp.eq.s32.totalorder %s34, 0
      %p264 = por %p262, %p263
      %s265 = ssub.s32 %s28, %s35
      %p266 = scmp.eq.s32.totalorder %s265, 0
      %s268 = sadd.s32 %s267, 1
      %s269 = scalar_select %p266, %s267, %s268
      %p272 = pneg %p266
      %p273 = scmp.eq.s32.totalorder %s28, 1
      %p274 = por %p272, %p273
      %p275 = scmp.ne.s32.totalorder %s267, %s270
      %p276 = scmp.eq.s32.totalorder %s28, 0
      %p277 = por %p275, %p276
      %p278 = scmp.ne.s32.totalorder %s267, %s270
      %p279 = scmp.eq.s32.totalorder %s33, 1
      %p280 = por %p278, %p279
      %p281 = scmp.ne.s32.totalorder %s270, %s271
      %p282 = scmp.eq.s32.totalorder %s33, 0
      %p283 = por %p281, %p282
      %p284 = scmp.ne.s32.totalorder %s270, %s271
      %p285 = scmp.eq.s32.totalorder %s34, 1
      %p286 = por %p284, %p285
      %p288 = scmp.ne.s32.totalorder %s271, %s287
      %p289 = scmp.eq.s32.totalorder %s34, 0
      %p290 = por %p288, %p289
      %s291 = ssub.s32 %s28, %s35
      %p292 = scmp.eq.s32.totalorder %s291, 0
      %s294 = sadd.s32 %s293, 1
      %s295 = scalar_select %p292, %s293, %s294
      %p298 = pneg %p292
      %p299 = scmp.eq.s32.totalorder %s28, 1
      %p300 = por %p298, %p299
      %p301 = scmp.ne.s32.totalorder %s293, %s296
      %p302 = scmp.eq.s32.totalorder %s28, 0
      %p303 = por %p301, %p302
      %p304 = scmp.ne.s32.totalorder %s293, %s296
      %p305 = scmp.eq.s32.totalorder %s33, 1
      %p306 = por %p304, %p305
      %p307 = scmp.ne.s32.totalorder %s296, %s297
      %p308 = scmp.eq.s32.totalorder %s33, 0
      %p309 = por %p307, %p308
      %p310 = scmp.ne.s32.totalorder %s296, %s297
      %p311 = scmp.eq.s32.totalorder %s34, 1
      %p312 = por %p310, %p311
      %p314 = scmp.ne.s32.totalorder %s297, %s313
      %p315 = scmp.eq.s32.totalorder %s34, 0
      %p316 = por %p314, %p315
      %s317 = ssub.s32 %s28, %s35
      %p318 = scmp.eq.s32.totalorder %s317, 0
      %s320 = sadd.s32 %s319, 1
      %s321 = scalar_select %p318, %s319, %s320
      %p324 = pneg %p318
      %p325 = scmp.eq.s32.totalorder %s28, 1
      %p326 = por %p324, %p325
      %p327 = scmp.ne.s32.totalorder %s319, %s322
      %p328 = scmp.eq.s32.totalorder %s28, 0
      %p329 = por %p327, %p328
      %p330 = scmp.ne.s32.totalorder %s319, %s322
      %p331 = scmp.eq.s32.totalorder %s33, 1
      %p332 = por %p330, %p331
      %p333 = scmp.ne.s32.totalorder %s322, %s323
      %p334 = scmp.eq.s32.totalorder %s33, 0
      %p335 = por %p333, %p334
      %p336 = scmp.ne.s32.totalorder %s322, %s323
      %p337 = scmp.eq.s32.totalorder %s34, 1
      %p338 = por %p336, %p337
      %p340 = scmp.ne.s32.totalorder %s323, %s339
      %p341 = scmp.eq.s32.totalorder %s34, 0
      %p342 = por %p340, %p341
      %s343 = ssub.s32 %s28, %s35
      %p344 = scmp.eq.s32.totalorder %s343, 0
      %s346 = sadd.s32 %s345, 1
      %s347 = scalar_select %p344, %s345, %s346
      %p350 = pneg %p344
      %p351 = scmp.eq.s32.totalorder %s28, 1
      %p352 = por %p350, %p351
      %p353 = scmp.ne.s32.totalorder %s345, %s348
      %p354 = scmp.eq.s32.totalorder %s28, 0
      %p355 = por %p353, %p354
      %p356 = scmp.ne.s32.totalorder %s345, %s348
      %p357 = scmp.eq.s32.totalorder %s33, 1
      %p358 = por %p356, %p357
      %p359 = scmp.ne.s32.totalorder %s348, %s349
      %p360 = scmp.eq.s32.totalorder %s33, 0
      %p361 = por %p359, %p360
      %p362 = scmp.ne.s32.totalorder %s348, %s349
      %p363 = scmp.eq.s32.totalorder %s34, 1
      %p364 = por %p362, %p363
      %p366 = scmp.ne.s32.totalorder %s349, %s365
      %p367 = scmp.eq.s32.totalorder %s34, 0
      %p368 = por %p366, %p367
      %p369 = scmp.le.s32.totalorder 1, %s28
      %p370 = scmp.lt.s32.totalorder %s28, 3
      %p371 = pnand %p369, %p370
      %p372 = pneg %p371
      // Predicated region
      $region9: #{tpu_custom_call.1} parent=5 // pred_check
        _
      $region10: #{tpu_custom_call.1} parent=5 // pred_check_branch
        %374 = sbr.rel (%p371) target = $region12
      $region11: #{tpu_custom_call.1} parent=5 // pred_region
        %s375 = ssub.s32 %s28, 1
        // Predicated region
        $region13: #{tpu_custom_call.1} parent=11 // pred_check
          %p376 = pneg %p153
        $region14: #{tpu_custom_call.1} parent=11 // pred_check_branch
          %378 = sbr.rel (%p376) target = $region16
        $region15: #{tpu_custom_call.1} parent=11 // pred_region
          _
        $region16: #{tpu_custom_call.1} parent=11 // pred_fallthru
          _
      $region12: #{tpu_custom_call.1} parent=5 // pred_fallthru
        _
      %p379 = scmp.lt.s32.totalorder %s28, 2
      // Predicated region
      $region17: #{tpu_custom_call.1} parent=5 // pred_check
        %p380 = pneg %p379
      $region18: #{tpu_custom_call.1} parent=5 // pred_check_branch
        %382 = sbr.rel (%p380) target = $region20
      $region19: #{tpu_custom_call.1} parent=5 // pred_region
        // Predicated region
        $region21: #{tpu_custom_call.1} parent=19 // pred_check
          %p383 = pneg %p48
        $region22: #{tpu_custom_call.1} parent=19 // pred_check_branch
          %385 = sbr.rel (%p383) target = $region24
        $region23: #{tpu_custom_call.1} parent=19 // pred_region
          %p386 = scmp.lt.s32.totalorder %s28, 1
          %s387 = scalar_select %p386, %s28, 1
          %s388 = smul.addr %s387, 2
          %s389 = smul.addr %s388, 4
          %s390 = scalar_lea.vmem %s0, %s389
        $region24: #{tpu_custom_call.1} parent=19 // pred_fallthru
          _
        // Predicated region
        $region25: #{tpu_custom_call.1} parent=19 // pred_check
          %p391 = pneg %p74
        $region26: #{tpu_custom_call.1} parent=19 // pred_check_branch
          %393 = sbr.rel (%p391) target = $region28
        $region27: #{tpu_custom_call.1} parent=19 // pred_region
          %p394 = scmp.lt.s32.totalorder %s28, 1
          %s395 = scalar_select %p394, %s28, 1
          %s396 = smul.addr %s395, 4
          %s397 = smul.addr %s396, 8
          %s398 = scalar_lea.vmem %s1, %s397
        $region28: #{tpu_custom_call.1} parent=19 // pred_fallthru
          _
        // Predicated region
        $region29: #{tpu_custom_call.1} parent=19 // pred_check
          %p399 = pneg %p100
        $region30: #{tpu_custom_call.1} parent=19 // pred_check_branch
          %401 = sbr.rel (%p399) target = $region32
        $region31: #{tpu_custom_call.1} parent=19 // pred_region
          %p402 = scmp.lt.s32.totalorder %s28, 1
          %s403 = scalar_select %p402, %s28, 1
          %s404 = smul.addr %s403, 2
          %s405 = smul.addr %s404, 8
          %s406 = scalar_lea.vmem %s2, %s405
        $region32: #{tpu_custom_call.1} parent=19 // pred_fallthru
          _
        // Predicated region
        $region33: #{tpu_custom_call.1} parent=19 // pred_check
          %p407 = pneg %p126
        $region34: #{tpu_custom_call.1} parent=19 // pred_check_branch
          %409 = sbr.rel (%p407) target = $region36
        $region35: #{tpu_custom_call.1} parent=19 // pred_region
          %p410 = scmp.lt.s32.totalorder %s28, 1
          %s411 = scalar_select %p410, %s28, 1
          %s412 = smul.addr %s411, 2
          %s413 = smul.addr %s412, 8
          %s414 = scalar_lea.vmem %s3, %s413
        $region36: #{tpu_custom_call.1} parent=19 // pred_fallthru
          _
        // Predicated region
        $region37: #{tpu_custom_call.1} parent=19 // pred_check
          %p415 = pneg %p173
        $region38: #{tpu_custom_call.1} parent=19 // pred_check_branch
          %417 = sbr.rel (%p415) target = $region40
        $region39: #{tpu_custom_call.1} parent=19 // pred_region
          %p418 = scmp.lt.s32.totalorder %s28, 1
          %s419 = scalar_select %p418, %s28, 1
          %s420 = smul.addr %s419, 2
          %s421 = smul.addr %s420, 8
          %s422 = scalar_lea.vmem %s5, %s421
        $region40: #{tpu_custom_call.1} parent=19 // pred_fallthru
          _
        // Predicated region
        $region41: #{tpu_custom_call.1} parent=19 // pred_check
          %p423 = pneg %p199
        $region42: #{tpu_custom_call.1} parent=19 // pred_check_branch
          %425 = sbr.rel (%p423) target = $region44
        $region43: #{tpu_custom_call.1} parent=19 // pred_region
          %p426 = scmp.lt.s32.totalorder %s28, 1
          %s427 = scalar_select %p426, %s28, 1
          %s428 = smul.addr %s427, 2
          %s429 = smul.addr %s428, 8
          %s430 = scalar_lea.vmem %s6, %s429
        $region44: #{tpu_custom_call.1} parent=19 // pred_fallthru
          _
        // Predicated region
        $region45: #{tpu_custom_call.1} parent=19 // pred_check
          %p431 = pneg %p225
        $region46: #{tpu_custom_call.1} parent=19 // pred_check_branch
          %433 = sbr.rel (%p431) target = $region48
        $region47: #{tpu_custom_call.1} parent=19 // pred_region
          %p434 = scmp.lt.s32.totalorder %s28, 1
          %s435 = scalar_select %p434, %s28, 1
          %s436 = smul.addr %s435, 2
          %s437 = scalar_lea.vmem %s7, %s436
        $region48: #{tpu_custom_call.1} parent=19 // pred_fallthru
          _
      $region20: #{tpu_custom_call.1} parent=5 // pred_fallthru
        _
      %p438 = scmp.le.s32.totalorder 1, %s28
      %p439 = scmp.lt.s32.totalorder %s28, 3
      %p440 = pnand %p438, %p439
      %p441 = pneg %p440
      // Predicated region
      $region49: #{tpu_custom_call.1} parent=5 // pred_check
        _
      $region50: #{tpu_custom_call.1} parent=5 // pred_check_branch
        %443 = sbr.rel (%p440) target = $region52
      $region51: #{tpu_custom_call.1} parent=5 // pred_region
        %s444 = ssub.s32 %s28, 1
        %p445 = scmp.lt.s32.totalorder %s33, 1
        %s446 = scalar_select %p445, %s33, 1
        %s447 = smul.addr %s446, 2
        %s448 = smul.addr %s447, 4
        %s449 = scalar_lea.vmem %s0, %s448
        %p450 = pneg %p54
        %p451 = pneg %p51
        %p452 = scmp.lt.s32.totalorder %s33, 1
        %s453 = scalar_select %p452, %s33, 1
        %s454 = smul.addr %s453, 4
        %s455 = smul.addr %s454, 8
        %s456 = scalar_lea.vmem %s1, %s455
        %p457 = pneg %p80
        %p458 = pneg %p77
        %p459 = scmp.lt.s32.totalorder %s33, 1
        %s460 = scalar_select %p459, %s33, 1
        %s461 = smul.addr %s460, 2
        %s462 = smul.addr %s461, 8
        %s463 = scalar_lea.vmem %s2, %s462
        %p464 = pneg %p106
        %p465 = pneg %p103
        %p466 = scmp.lt.s32.totalorder %s33, 1
        %s467 = scalar_select %p466, %s33, 1
        %s468 = smul.addr %s467, 2
        %s469 = smul.addr %s468, 8
        %s470 = scalar_lea.vmem %s3, %s469
        %p471 = pneg %p132
        %p472 = pneg %p129
        %p473 = pneg %p153
        %p474 = pneg %p150
        %p475 = scmp.lt.s32.totalorder %s33, 1
        %s476 = scalar_select %p475, %s33, 1
        %s477 = smul.addr %s476, 2
        %s478 = smul.addr %s477, 8
        %s479 = scalar_lea.vmem %s5, %s478
        %p480 = pneg %p179
        %p481 = pneg %p176
        %p482 = scmp.lt.s32.totalorder %s33, 1
        %s483 = scalar_select %p482, %s33, 1
        %s484 = smul.addr %s483, 2
        %s485 = smul.addr %s484, 8
        %s486 = scalar_lea.vmem %s6, %s485
        %p487 = pneg %p205
        %p488 = pneg %p202
        %p489 = scmp.lt.s32.totalorder %s33, 1
        %s490 = scalar_select %p489, %s33, 1
        %s491 = smul.addr %s490, 2
        %s492 = scalar_lea.vmem %s7, %s491
        %p493 = pneg %p231
        %p494 = pneg %p228
        %p495 = pneg %p257
        %p496 = pneg %p254
        %s497 = sand.u32 %s244, 1
        %s498 = scalar_lea.sflag [#allocation6], %s497
        %s499 = sand.u32 %s244, 1
        %s500 = smul.addr %s499, 8
        %s501 = scalar_lea.vmem [#allocation5], %s500
        %p502 = pneg %p283
        %p503 = pneg %p280
        %s504 = sand.u32 %s33, 1
        %s505 = scalar_lea.sflag [#allocation8], %s504
        %s506 = sand.u32 %s270, 1
        %s507 = smul.addr %s506, 2
        %s508 = scalar_lea.vmem [#allocation7], %s507
        %p509 = pneg %p309
        %p510 = pneg %p306
        %s511 = sand.u32 %s33, 1
        %s512 = scalar_lea.sflag [#allocation8], %s511
        %s513 = sand.u32 %s296, 1
        %s514 = smul.addr %s513, 2
        %s515 = scalar_lea.vmem [#allocation9], %s514
        %p516 = pneg %p335
        %p517 = pneg %p332
        %s518 = sand.u32 %s33, 1
        %s519 = scalar_lea.sflag [#allocation11], %s518
        %s520 = sand.u32 %s322, 1
        %s521 = smul.addr %s520, 2
        %s522 = scalar_lea.vmem [#allocation10], %s521
        %p523 = pneg %p361
        %p524 = pneg %p358
        %s525 = sand.u32 %s33, 1
        %s526 = scalar_lea.sflag [#allocation11], %s525
        %s527 = sand.u32 %s348, 1
        %s528 = smul.addr %s527, 2
        %s529 = scalar_lea.vmem [#allocation12], %s528
        %p530 = scmp.lt.s32.totalorder %s33, 1
        %s531 = scalar_select %p530, %s33, 1
        %s532 = smul.addr %s531, 2
        %s533 = smul.addr %s532, 4
        %s534 = scalar_lea.vmem %s0, %s533
        %p535 = scmp.lt.s32.totalorder %s33, 1
        %s536 = scalar_select %p535, %s33, 1
        %s537 = smul.addr %s536, 4
        %s538 = smul.addr %s537, 8
        %s539 = scalar_lea.vmem %s1, %s538
        %p540 = scmp.lt.s32.totalorder %s33, 1
        %s541 = scalar_select %p540, %s33, 1
        %s542 = smul.addr %s541, 2
        %s543 = smul.addr %s542, 8
        %s544 = scalar_lea.vmem %s2, %s543
        %p545 = scmp.lt.s32.totalorder %s33, 1
        %s546 = scalar_select %p545, %s33, 1
        %s547 = smul.addr %s546, 2
        %s548 = smul.addr %s547, 8
        %s549 = scalar_lea.vmem %s3, %s548
        %p550 = scmp.lt.s32.totalorder %s33, 1
        %s551 = scalar_select %p550, %s33, 1
        %s552 = smul.addr %s551, 2
        %s553 = smul.addr %s552, 8
        %s554 = scalar_lea.vmem %s5, %s553
        %p555 = scmp.lt.s32.totalorder %s33, 1
        %s556 = scalar_select %p555, %s33, 1
        %s557 = smul.addr %s556, 2
        %s558 = smul.addr %s557, 8
        %s559 = scalar_lea.vmem %s6, %s558
        %p560 = scmp.lt.s32.totalorder %s33, 1
        %s561 = scalar_select %p560, %s33, 1
        %s562 = smul.addr %s561, 2
        %s563 = scalar_lea.vmem %s7, %s562
        %v564 = vld [vmem:[%s534] sm:$0xff]
        %v565 = vld [vmem:[%s539] sm:$0xff]
        %v566 = vld [vmem:[%s539 + $0x8] sm:$0xff]
        %v567 = vld [vmem:[%s539 + $0x10] sm:$0xff]
        %v568 = vld [vmem:[%s539 + $0x18] sm:$0xff]
        %v569 = vld [vmem:[%s4] sm:$0xf]
        %v570 = vld [vmem:[%s563] sm:$0x3]
        %v572 = vrot.slane %v564, 6
        %v574 = vsub.f32 %v564, %v572
        %v575 = vadd.f32 %v574, 1e-07
        %v577 = vrot.slane %v575, 5
        %v578 = vrot.slane %v577, 4
        %v580 = vmul.f32 %v574, %v578
        %v581 = vrot.slane %v572, 4
        %v583 = vadd.f32 %v564, %v581
        %v584 = vlaneseq
        %v585 = vshrl.u32 %v584, 7
        %v586 = vlaneseq
        %v587 = vand.u32 %v586, 127
        %v588 = vld [vmem:[%s549] sm:$0xff]
        %589 = vset.pattern.permute.xlu0 0
        %590 = vperm.xlu0 %589, %v588
        %v591 = vpop.permute.xlu0 %590
        %vm592 = vcmp.eq.s32.totalorder %v587, %v591
        %v593 = vsel %vm592, 1, 0
        %v594 = vcvt.s32.f32 %v593
        %s595 = scalar_lea.vmem %s549, 8
        %v596 = vld [vmem:[%s595] sm:$0xff]
        %597 = vset.pattern.permute.xlu0 0
        %598 = vperm.xlu0 %597, %v596
        %v599 = vpop.permute.xlu0 %598
        %vm600 = vcmp.eq.s32.totalorder %v587, %v599
        %v601 = vsel %vm600, 1, 0
        %v602 = vcvt.s32.f32 %v601
        %vm603 = vcmask 130048
        %v605 = vsel %vm603, %v594, 0
        %v608 = vsel %vm603, %v602, 0
        %610 = vmatprep.subr.mxu0 0.0
        %611 = vmatpush1.msra.mxu0 0.0
        %612 = vmatprep.subr.mxu0 0.0
        %613 = vmatpush1.msra.mxu0 0.0
        %614 = vmatprep.subr.mxu0 0.0
        %615 = vmatpush1.msra.mxu0 0.0
        %616 = vmatprep.subr.mxu0 0.0
        %617 = vmatpush1.msra.mxu0 0.0
        %618 = vmatprep.subr.mxu0 0.0
        %619 = vmatpush1.msra.mxu0 0.0
        %620 = vmatprep.subr.mxu0 0.0
        %621 = vmatpush1.msra.mxu0 0.0
        %622 = vmatprep.subr.mxu0 0.0
        %623 = vmatpush1.msra.mxu0 0.0
        %624 = vmatprep.subr.mxu0 0.0
        %625 = vmatpush1.msra.mxu0 0.0
        %626 = vmatprep.subr.mxu0 0.0
        %627 = vmatpush1.msra.mxu0 0.0
        %628 = vmatprep.subr.mxu0 0.0
        %629 = vmatpush1.msra.mxu0 0.0
        %630 = vmatprep.subr.mxu0 0.0
        %631 = vmatpush1.msra.mxu0 0.0
        %632 = vmatprep.subr.mxu0 0.0
        %633 = vmatpush1.msra.mxu0 0.0
        %634 = vmatprep.subr.mxu0 0.0
        %635 = vmatpush1.msra.mxu0 0.0
        %636 = vmatprep.subr.mxu0 0.0
        %637 = vmatpush1.msra.mxu0 0.0
        %638 = vmatprep.subr.mxu0 %v568
        %639 = vmatpush1.msra.mxu0 %v567
        %640 = vmatprep.subr.mxu0 %v566
        %641 = vmatpush1.msra.mxu0 %v565
        %642 = vmatprep.subr.mxu0 0.0
        %643 = vmatpush2.msra.mxu0 0.0
        %644 = vmatprep.subr.mxu0 0.0
        %645 = vmatpush2.msra.mxu0 0.0
        %646 = vmatprep.subr.mxu0 0.0
        %647 = vmatpush2.msra.mxu0 0.0
        %648 = vmatprep.subr.mxu0 0.0
        %649 = vmatpush2.msra.mxu0 0.0
        %650 = vmatprep.subr.mxu0 0.0
        %651 = vmatpush2.msra.mxu0 0.0
        %652 = vmatprep.subr.mxu0 0.0
        %653 = vmatpush2.msra.mxu0 0.0
        %654 = vmatprep.subr.mxu0 0.0
        %655 = vmatpush2.msra.mxu0 0.0
        %656 = vmatprep.subr.mxu0 0.0
        %657 = vmatpush2.msra.mxu0 0.0
        %658 = vmatprep.subr.mxu0 0.0
        %659 = vmatpush2.msra.mxu0 0.0
        %660 = vmatprep.subr.mxu0 0.0
        %661 = vmatpush2.msra.mxu0 0.0
        %662 = vmatprep.subr.mxu0 0.0
        %663 = vmatpush2.msra.mxu0 0.0
        %664 = vmatprep.subr.mxu0 0.0
        %665 = vmatpush2.msra.mxu0 0.0
        %666 = vmatprep.subr.mxu0 0.0
        %667 = vmatpush2.msra.mxu0 0.0
        %668 = vmatprep.subr.mxu0 0.0
        %669 = vmatpush2.msra.mxu0 0.0
        %670 = vmatprep.subr.mxu0 0.0
        %671 = vmatpush2.msra.mxu0 0.0
        %672 = vmatprep.subr.mxu0 0.0
        %673 = vmatpush2.msra.mxu0 0.0
        %674 = vmatprep.mubr.f32.mxu0 0.0
        %675 = vmatmul.mubr.f32.gmra.mxu0 %v605
        %v676 = vpop.f32.mrf.mxu0
        %v677 = vadd.f32 0.0, %v676
        %v678 = vpop.f32.mrf.mxu0
        %v679 = vadd.f32 0.0, %v678
        %680 = vmatprep.mubr.f32.mxu0 0.0
        %681 = vmatmul.mubr.f32.gmra.mxu0 %v608
        %v682 = vpop.f32.mrf.mxu0
        %v683 = vadd.f32 0.0, %v682
        %v684 = vpop.f32.mrf.mxu0
        %v685 = vadd.f32 0.0, %v684
        %686 = vdwg.mxu0
        %687 = vst [vmem:[#allocation3] sm:$0xff] %v677
        %688 = vst [vmem:[#allocation3 + $0x8] sm:$0xff] %v679
        %s689 = scalar_lea.vmem [#allocation3], 16
        %690 = vst [vmem:[%s689] sm:$0xff] %v683
        %691 = vst [vmem:[%s689 + $0x8] sm:$0xff] %v685
        loop: start=0, step=1, limit=2
        $region53: #{tpu_custom_call.1} parent=51 // loop_pre_header
          _
        $region54: #{tpu_custom_call.1} parent=51 // loop_header
          %s693 = sphi 0, %s697
          %p694 = scmp.ge.s32.totalorder %s693, 2
          %v698 = vphi 0.0, %v1098
          %v699 = vphi 0.0, %v1099
          %v700 = vphi -1.0, %v1104
          %v701 = vphi -1.0, %v1105
          %v702 = vphi 0, %v1102
          %v703 = vphi 0, %v1103
          %v704 = vphi 16, %v1109
          %v705 = vphi 16, %v1111
        $region55: #{tpu_custom_call.1} parent=51 // loop_header_branch
          %696 = sbr.rel (%p694) target = $region59
        $region56: #{tpu_custom_call.1} parent=51 // loop_body
          %s706 = smul.u32 %s693, 8
          %s707 = scalar_lea.vmem %s544, %s706
          %v708 = vld [vmem:[%s707] sm:$0xff]
          %s709 = scalar_lea.vmem %s554, %s706
          %v710 = vld [vmem:[%s709] sm:$0xff]
          %s711 = scalar_lea.vmem %s559, %s706
          %v712 = vld [vmem:[%s711] sm:$0xff]
          %v714 = vlaneseq
          %v715 = vshrl.u32 %v714, 7
          %v716 = vsub.s32 0, %v715
          %v717 = vrot.slane %v569, %v716
          %v718 = vlaneseq
          %v719 = vshrl.u32 %v718, 7
          %v720 = vsub.s32 2, %v719
          %v721 = vrot.slane %v569, %v720
          %v724 = vlaneseq
          %v725 = vshrl.u32 %v724, 7
          %v726 = vsub.s32 0, %v725
          %v727 = vrot.slane %v717, %v726
          %v728 = vlaneseq
          %v729 = vshrl.u32 %v728, 7
          %v730 = vsub.s32 0, %v729
          %v731 = vrot.slane %v721, %v730
          %733 = vset.pattern.permute.xlu0 0
          %734 = vperm.xlu0 %733, %v708
          %v735 = vpop.permute.xlu0 %734
          %v737 = vsub.f32 %v727, %v735
          %v738 = vsub.f32 %v731, %v735
          %v739 = vlaneseq
          %v740 = vshrl.u32 %v739, 7
          %v741 = vsub.s32 1, %v740
          %v742 = vrot.slane %v569, %v741
          %v743 = vlaneseq
          %v744 = vshrl.u32 %v743, 7
          %v745 = vsub.s32 3, %v744
          %v746 = vrot.slane %v569, %v745
          %v749 = vlaneseq
          %v750 = vshrl.u32 %v749, 7
          %v751 = vsub.s32 1, %v750
          %v752 = vrot.slane %v742, %v751
          %v753 = vlaneseq
          %v754 = vshrl.u32 %v753, 7
          %v755 = vsub.s32 1, %v754
          %v756 = vrot.slane %v746, %v755
          %757 = vset.pattern.permute.xlu0 1
          %758 = vperm.xlu0 %757, %v708
          %v759 = vpop.permute.xlu0 %758
          %v761 = vsub.f32 %v752, %v759
          %v762 = vsub.f32 %v756, %v759
          %v763 = vmin.f32 %v737, %v761
          %v764 = vmin.f32 %v738, %v762
          %765 = vset.pattern.permute.xlu0 2
          %766 = vperm.xlu0 %765, %v708
          %v767 = vpop.permute.xlu0 %766
          %v769 = vsub.f32 %v767, %v727
          %v770 = vsub.f32 %v767, %v731
          %771 = vset.pattern.permute.xlu0 3
          %772 = vperm.xlu0 %771, %v708
          %v773 = vpop.permute.xlu0 %772
          %v775 = vsub.f32 %v773, %v752
          %v776 = vsub.f32 %v773, %v756
          %v777 = vmin.f32 %v769, %v775
          %v778 = vmin.f32 %v770, %v776
          %v779 = vmin.f32 %v763, %v777
          %v780 = vmin.f32 %v764, %v778
          %vm781 = vcmp.gt.f32.partialorder %v779, 1e-09
          %vm782 = vcmp.gt.f32.partialorder %v780, 1e-09
          %vm783 = vcmp.ne.f32.partialorder %v710, 0.0
          %v784 = vsel %vm783, 1, 0
          %785 = vset.pattern.permute.xlu0 0
          %786 = vperm.xlu0 %785, %v784
          %v787 = vpop.permute.xlu0 %786
          %vm788 = vcmp.eq.s32.totalorder %v787, 1
          %vm789 = vmand %vm781, %vm788
          %vm790 = vmand %vm782, %vm788
          %s791 = smul.u32 %s693, 2
          %s792 = smul.addr %s791, 8
          %s793 = scalar_lea.vmem [#allocation3], %s792
          %v794 = vld [vmem:[%s793] sm:$0xff]
          %v795 = vld [vmem:[%s793 + $0x8] sm:$0xff]
          %796 = vrot.lane.b32.xlu0 %v708, 2
          %v797 = vpop.permute.xlu0 %796
          %v799 = vsub.f32 %v708, %v797
          %v800 = vadd.f32 %v799, 1e-07
          %v801 = vlaneseq
          %v802 = vshrl.u32 %v801, 7
          %v803 = vsub.s32 2, %v802
          %v804 = vrot.slane %v564, %v803
          %v805 = vlaneseq
          %v806 = vshrl.u32 %v805, 7
          %v807 = vsub.s32 6, %v806
          %v808 = vrot.slane %v564, %v807
          %v811 = vlaneseq
          %v812 = vshrl.u32 %v811, 7
          %v813 = vsub.s32 2, %v812
          %v814 = vrot.slane %v804, %v813
          %v815 = vlaneseq
          %v816 = vshrl.u32 %v815, 7
          %v817 = vsub.s32 2, %v816
          %v818 = vrot.slane %v808, %v817
          %v819 = vmin.f32 %v767, %v814
          %v820 = vmin.f32 %v767, %v818
          %v821 = vlaneseq
          %v822 = vshrl.u32 %v821, 7
          %v823 = vsub.s32 0, %v822
          %v824 = vrot.slane %v564, %v823
          %v825 = vlaneseq
          %v826 = vshrl.u32 %v825, 7
          %v827 = vsub.s32 4, %v826
          %v828 = vrot.slane %v564, %v827
          %v831 = vlaneseq
          %v832 = vshrl.u32 %v831, 7
          %v833 = vsub.s32 0, %v832
          %v834 = vrot.slane %v824, %v833
          %v835 = vlaneseq
          %v836 = vshrl.u32 %v835, 7
          %v837 = vsub.s32 0, %v836
          %v838 = vrot.slane %v828, %v837
          %v839 = vmax.f32 %v735, %v834
          %v840 = vmax.f32 %v735, %v838
          %v841 = vsub.f32 %v819, %v839
          %v842 = vsub.f32 %v820, %v840
          %v843 = vmax.f32 %v841, 0.0
          %v844 = vmax.f32 %v842, 0.0
          %v845 = vlaneseq
          %v846 = vshrl.u32 %v845, 7
          %v847 = vsub.s32 3, %v846
          %v848 = vrot.slane %v564, %v847
          %v849 = vlaneseq
          %v850 = vshrl.u32 %v849, 7
          %v851 = vsub.s32 7, %v850
          %v852 = vrot.slane %v564, %v851
          %v855 = vlaneseq
          %v856 = vshrl.u32 %v855, 7
          %v857 = vsub.s32 3, %v856
          %v858 = vrot.slane %v848, %v857
          %v859 = vlaneseq
          %v860 = vshrl.u32 %v859, 7
          %v861 = vsub.s32 3, %v860
          %v862 = vrot.slane %v852, %v861
          %v863 = vmin.f32 %v773, %v858
          %v864 = vmin.f32 %v773, %v862
          %v865 = vlaneseq
          %v866 = vshrl.u32 %v865, 7
          %v867 = vsub.s32 1, %v866
          %v868 = vrot.slane %v564, %v867
          %v869 = vlaneseq
          %v870 = vshrl.u32 %v869, 7
          %v871 = vsub.s32 5, %v870
          %v872 = vrot.slane %v564, %v871
          %v875 = vlaneseq
          %v876 = vshrl.u32 %v875, 7
          %v877 = vsub.s32 1, %v876
          %v878 = vrot.slane %v868, %v877
          %v879 = vlaneseq
          %v880 = vshrl.u32 %v879, 7
          %v881 = vsub.s32 1, %v880
          %v882 = vrot.slane %v872, %v881
          %v883 = vmax.f32 %v759, %v878
          %v884 = vmax.f32 %v759, %v882
          %v885 = vsub.f32 %v863, %v883
          %v886 = vsub.f32 %v864, %v884
          %v887 = vmax.f32 %v885, 0.0
          %v888 = vmax.f32 %v886, 0.0
          %v889 = vmul.f32 %v843, %v887
          %v890 = vmul.f32 %v844, %v888
          %892 = vrot.lane.b32.xlu0 %v800, 127
          %v893 = vpop.permute.xlu0 %892
          %v895 = vmul.f32 %v799, %v893
          %897 = vset.pattern.permute.xlu0 2
          %898 = vperm.xlu0 %897, %v895
          %v899 = vpop.permute.xlu0 %898
          %v902 = vlaneseq
          %v903 = vshrl.u32 %v902, 7
          %v904 = vsub.s32 2, %v903
          %v905 = vrot.slane %v580, %v904
          %v906 = vlaneseq
          %v907 = vshrl.u32 %v906, 7
          %v908 = vsub.s32 6, %v907
          %v909 = vrot.slane %v580, %v908
          %v912 = vlaneseq
          %v913 = vshrl.u32 %v912, 7
          %v914 = vsub.s32 2, %v913
          %v915 = vrot.slane %v905, %v914
          %v916 = vlaneseq
          %v917 = vshrl.u32 %v916, 7
          %v918 = vsub.s32 2, %v917
          %v919 = vrot.slane %v909, %v918
          %v920 = vadd.f32 %v899, %v915
          %v921 = vadd.f32 %v899, %v919
          %v922 = vsub.f32 %v920, %v889
          %v923 = vsub.f32 %v921, %v890
          %v924 = vadd.f32 %v922, 1e-07
          %v925 = vadd.f32 %v923, 1e-07
          %v926 = vrcp.pop %v924
          %v927 = vmul.f32 %v889, %v926
          %v928 = vrcp.pop %v925
          %v929 = vmul.f32 %v890, %v928
          %v930 = vmax.f32 %v767, %v814
          %v931 = vmax.f32 %v767, %v818
          %v932 = vmin.f32 %v735, %v834
          %v933 = vmin.f32 %v735, %v838
          %v934 = vsub.f32 %v930, %v932
          %v935 = vsub.f32 %v931, %v933
          %v936 = vmax.f32 %v773, %v858
          %v937 = vmax.f32 %v773, %v862
          %v938 = vmin.f32 %v759, %v878
          %v939 = vmin.f32 %v759, %v882
          %v940 = vsub.f32 %v936, %v938
          %v941 = vsub.f32 %v937, %v939
          %v942 = vmul.f32 %v934, %v934
          %v943 = vmul.f32 %v935, %v935
          %v944 = vmul.f32 %v940, %v940
          %v945 = vmul.f32 %v941, %v941
          %v946 = vadd.f32 %v942, %v944
          %v947 = vadd.f32 %v943, %v945
          %v948 = vadd.f32 %v946, 1e-07
          %v949 = vadd.f32 %v947, 1e-07
          %v951 = vlaneseq
          %v952 = vshrl.u32 %v951, 7
          %v953 = vsub.s32 0, %v952
          %v954 = vrot.slane %v583, %v953
          %v955 = vlaneseq
          %v956 = vshrl.u32 %v955, 7
          %v957 = vsub.s32 4, %v956
          %v958 = vrot.slane %v583, %v957
          %v961 = vlaneseq
          %v962 = vshrl.u32 %v961, 7
          %v963 = vsub.s32 0, %v962
          %v964 = vrot.slane %v954, %v963
          %v965 = vlaneseq
          %v966 = vshrl.u32 %v965, 7
          %v967 = vsub.s32 0, %v966
          %v968 = vrot.slane %v958, %v967
          %v969 = vsub.f32 %v964, %v735
          %v970 = vsub.f32 %v968, %v735
          %v971 = vsub.f32 %v969, %v767
          %v972 = vsub.f32 %v970, %v767
          %v973 = vmul.f32 %v971, %v971
          %v974 = vmul.f32 %v972, %v972
          %v975 = vlaneseq
          %v976 = vshrl.u32 %v975, 7
          %v977 = vsub.s32 1, %v976
          %v978 = vrot.slane %v583, %v977
          %v979 = vlaneseq
          %v980 = vshrl.u32 %v979, 7
          %v981 = vsub.s32 5, %v980
          %v982 = vrot.slane %v583, %v981
          %v985 = vlaneseq
          %v986 = vshrl.u32 %v985, 7
          %v987 = vsub.s32 1, %v986
          %v988 = vrot.slane %v978, %v987
          %v989 = vlaneseq
          %v990 = vshrl.u32 %v989, 7
          %v991 = vsub.s32 1, %v990
          %v992 = vrot.slane %v982, %v991
          %v993 = vsub.f32 %v988, %v759
          %v994 = vsub.f32 %v992, %v759
          %v995 = vsub.f32 %v993, %v773
          %v996 = vsub.f32 %v994, %v773
          %v997 = vmul.f32 %v995, %v995
          %v998 = vmul.f32 %v996, %v996
          %v999 = vadd.f32 %v973, %v997
          %v1000 = vadd.f32 %v974, %v998
          %v1001 = vmul.f32 %v999, 0.25
          %v1002 = vmul.f32 %v1000, 0.25
          %v1004 = vlaneseq
          %v1005 = vshrl.u32 %v1004, 7
          %v1006 = vsub.s32 0, %v1005
          %v1007 = vrot.slane %v570, %v1006
          %v1008 = vlaneseq
          %v1009 = vshrl.u32 %v1008, 7
          %v1010 = vsub.s32 1, %v1009
          %v1011 = vrot.slane %v570, %v1010
          %1015 = vset.pattern.permute.xlu0 0
          %1016 = vperm.xlu0 %1015, %v712
          %v1017 = vpop.permute.xlu0 %1016
          %v1019 = vsub.f32 %v1007, %v1017
          %v1020 = vsub.f32 %v1011, %v1017
          %v1021 = vmul.f32 %v1019, %v1019
          %v1022 = vmul.f32 %v1020, %v1020
          %v1023 = vmul.f32 %v1021, 0.40528473
          %v1024 = vmul.f32 %v1022, 0.40528473
          %v1025 = vsub.f32 %v1023, %v927
          %v1026 = vsub.f32 %v1024, %v929
          %v1027 = vadd.f32 %v1025, 1.0000001
          %v1028 = vadd.f32 %v1026, 1.0000001
          %v1029 = vrcp.pop %v1027
          %v1030 = vmul.f32 %v1023, %v1029
          %v1031 = vrcp.pop %v1028
          %v1032 = vmul.f32 %v1024, %v1031
          %v1033 = vrcp.pop %v948
          %v1034 = vmul.f32 %v1001, %v1033
          %v1035 = vrcp.pop %v949
          %v1036 = vmul.f32 %v1002, %v1035
          %v1037 = vmul.f32 %v1023, %v1030
          %v1038 = vmul.f32 %v1024, %v1032
          %v1039 = vadd.f32 %v1034, %v1037
          %v1040 = vadd.f32 %v1036, %v1038
          %v1041 = vsub.f32 %v927, %v1039
          %v1042 = vsub.f32 %v929, %v1040
          %v1043 = vmax.f32 %v1041, 0.0
          %v1044 = vmax.f32 %v1042, 0.0
          %v1045 = vsel %vm789, %v1043, 0.0
          %v1046 = vsel %vm790, %v1044, 0.0
          %v1047 = vmul.f32 %v1045, %v1045
          %v1048 = vmul.f32 %v1046, %v1046
          %v1049 = vmul.f32 %v1047, %v1047
          %v1050 = vmul.f32 %v1048, %v1048
          %v1051 = vmul.f32 %v1047, %v1049
          %v1052 = vmul.f32 %v1048, %v1050
          %v1053 = vmul.f32 %v794, %v1051
          %v1054 = vmul.f32 %v795, %v1052
          %v1055 = vmax.f32 %v1053, %v1054
          %1056 = vmax.xlane.f32.xlu0 %v1055
          %v1057 = vpop.xlane.xlu0 %1056
          %vm1058 = vcmp.ge.f32.partialorder %v1053, %v1057
          %vm1059 = vcmp.ge.f32.partialorder %v1054, %v1057
          %v1060 = vsel %vm1058, -1.0, %v1053
          %v1061 = vsel %vm1059, -1.0, %v1054
          %v1062 = vmax.f32 %v1060, %v1061
          %1063 = vmax.xlane.f32.xlu0 %v1062
          %v1064 = vpop.xlane.xlu0 %1063
          %vm1065 = vcmp.ge.f32.partialorder %v1060, %v1064
          %vm1066 = vcmp.ge.f32.partialorder %v1061, %v1064
          %v1067 = vsel %vm1065, -1.0, %v1060
          %v1068 = vsel %vm1066, -1.0, %v1061
          %v1069 = vmax.f32 %v1067, %v1068
          %1070 = vmax.xlane.f32.xlu0 %v1069
          %v1071 = vpop.xlane.xlu0 %1070
          %vm1072 = vcmp.ge.f32.partialorder %v1067, %v1071
          %vm1073 = vcmp.ge.f32.partialorder %v1068, %v1071
          %v1074 = vsel %vm1072, -1.0, %v1067
          %v1075 = vsel %vm1073, -1.0, %v1068
          %v1076 = vmax.f32 %v1074, %v1075
          %1077 = vmax.xlane.f32.xlu0 %v1076
          %v1078 = vpop.xlane.xlu0 %1077
          %vm1079 = vcmp.ge.f32.partialorder %v1053, %v1078
          %vm1080 = vcmp.ge.f32.partialorder %v1054, %v1078
          %vm1081 = vmand %vm1079, %vm789
          %vm1082 = vmand %vm1080, %vm790
          %s1083 = smul.addr %s791, 8
          %s1084 = scalar_lea.vmem [#allocation2], %s1083
          %1085 = vst [vmem:[%s1084] sm:$0xff] %v1053
          %1086 = vst [vmem:[%s1084 + $0x8] sm:$0xff] %v1054
          %1087 = vst [vmem:[%s793] sm:$0xff] %v1045
          %1088 = vst [vmem:[%s793 + $0x8] sm:$0xff] %v1046
          %s1089 = scalar_lea.vmem [#allocation4], %s706
          %vm1090 = vcmask 7168
          %1091 = vst.msk [vmem:[%s1089] sm:$0xff] %vm1090, %v1078
          %v1092 = vstv %s706
          %v1093 = vadd.s32 %v585, %v1092
          %v1094 = vsel %vm1081, 1, 0
          %v1095 = vsel %vm1082, 1, 0
          %v1096 = vcvt.s32.f32 %v1094
          %v1097 = vcvt.s32.f32 %v1095
          %v1098 = vadd.f32 %v698, %v1096
          %v1099 = vadd.f32 %v699, %v1097
          %vm1100 = vcmp.gt.f32.partialorder %v1045, %v700
          %vm1101 = vcmp.gt.f32.partialorder %v1046, %v701
          %v1102 = vsel %vm1100, %v1093, %v702
          %v1103 = vsel %vm1101, %v1093, %v703
          %v1104 = vsel %vm1100, %v1045, %v700
          %v1105 = vsel %vm1101, %v1046, %v701
          %v1106 = vsel %vm1081, %v1093, 16
          %v1107 = vsel %vm1082, %v1093, 16
          %vm1108 = vcmp.lt.s32.totalorder %v704, %v1106
          %v1109 = vsel %vm1108, %v704, %v1106
          %vm1110 = vcmp.lt.s32.totalorder %v705, %v1107
          %v1111 = vsel %vm1110, %v705, %v1107
        $region57: #{tpu_custom_call.1} parent=51 // loop_footer
          %s697 = sadd.s32 1, %s693
        $region58: #{tpu_custom_call.1} parent=51 // loop_footer_branch
          %692 = sbr.rel target = $region54
        $region59: #{tpu_custom_call.1} parent=51 // loop_exit
          _
        %v1112 = vrot.slane %v698, 4
        %v1113 = vadd.f32 %v698, %v1112
        %v1114 = vrot.slane %v1113, 2
        %v1115 = vadd.f32 %v1113, %v1114
        %v1116 = vrot.slane %v1115, 1
        %v1117 = vadd.f32 %v1115, %v1116
        %v1118 = vrot.slane %v699, 4
        %v1119 = vadd.f32 %v699, %v1118
        %v1120 = vrot.slane %v1119, 2
        %v1121 = vadd.f32 %v1119, %v1120
        %v1122 = vrot.slane %v1121, 1
        %v1123 = vadd.f32 %v1121, %v1122
        %v1124 = vrot.slane %v700, 4
        %v1125 = vmax.f32 %v700, %v1124
        %v1126 = vrot.slane %v1125, 2
        %v1127 = vmax.f32 %v1125, %v1126
        %v1128 = vrot.slane %v1127, 1
        %v1129 = vmax.f32 %v1127, %v1128
        %v1130 = vrot.slane %v701, 4
        %v1131 = vmax.f32 %v701, %v1130
        %v1132 = vrot.slane %v1131, 2
        %v1133 = vmax.f32 %v1131, %v1132
        %v1134 = vrot.slane %v1133, 1
        %v1135 = vmax.f32 %v1133, %v1134
        %vm1136 = vcmp.eq.f32.partialorder %v700, %v1129
        %vm1137 = vcmp.eq.f32.partialorder %v701, %v1135
        %v1138 = vsel %vm1136, %v702, 16
        %v1139 = vsel %vm1137, %v703, 16
        %v1140 = vrot.slane %v1138, 4
        %vm1141 = vcmp.lt.s32.totalorder %v1138, %v1140
        %v1142 = vsel %vm1141, %v1138, %v1140
        %v1143 = vrot.slane %v1142, 2
        %vm1144 = vcmp.lt.s32.totalorder %v1142, %v1143
        %v1145 = vsel %vm1144, %v1142, %v1143
        %v1146 = vrot.slane %v1145, 1
        %vm1147 = vcmp.lt.s32.totalorder %v1145, %v1146
        %v1148 = vsel %vm1147, %v1145, %v1146
        %v1149 = vrot.slane %v1139, 4
        %vm1150 = vcmp.lt.s32.totalorder %v1139, %v1149
        %v1151 = vsel %vm1150, %v1139, %v1149
        %v1152 = vrot.slane %v1151, 2
        %vm1153 = vcmp.lt.s32.totalorder %v1151, %v1152
        %v1154 = vsel %vm1153, %v1151, %v1152
        %v1155 = vrot.slane %v1154, 1
        %vm1156 = vcmp.lt.s32.totalorder %v1154, %v1155
        %v1157 = vsel %vm1156, %v1154, %v1155
        %v1158 = vrot.slane %v704, 4
        %vm1159 = vcmp.lt.s32.totalorder %v704, %v1158
        %v1160 = vsel %vm1159, %v704, %v1158
        %v1161 = vrot.slane %v1160, 2
        %vm1162 = vcmp.lt.s32.totalorder %v1160, %v1161
        %v1163 = vsel %vm1162, %v1160, %v1161
        %v1164 = vrot.slane %v1163, 1
        %vm1165 = vcmp.lt.s32.totalorder %v1163, %v1164
        %v1166 = vsel %vm1165, %v1163, %v1164
        %v1167 = vrot.slane %v705, 4
        %vm1168 = vcmp.lt.s32.totalorder %v705, %v1167
        %v1169 = vsel %vm1168, %v705, %v1167
        %v1170 = vrot.slane %v1169, 2
        %vm1171 = vcmp.lt.s32.totalorder %v1169, %v1170
        %v1172 = vsel %vm1171, %v1169, %v1170
        %v1173 = vrot.slane %v1172, 1
        %vm1174 = vcmp.lt.s32.totalorder %v1172, %v1173
        %v1175 = vsel %vm1174, %v1172, %v1173
        %vm1176 = vcmp.gt.f32.partialorder %v1117, 1.0
        %vm1177 = vcmp.gt.f32.partialorder %v1123, 1.0
        %v1178 = vsel %vm1176, 1.0, %v1117
        %v1179 = vsel %vm1177, 1.0, %v1123
        %vm1180 = vcmp.lt.s32.totalorder %v1166, 16
        %vm1181 = vcmp.lt.s32.totalorder %v1175, 16
        %v1182 = vsel %vm1180, %v1166, 0
        %v1183 = vsel %vm1181, %v1175, 0
        %v1184 = vsel %vm1176, %v1148, %v1182
        %v1185 = vsel %vm1177, %v1157, %v1183
        loop: start=0, step=1, limit=2
        $region60: #{tpu_custom_call.1} parent=51 // loop_pre_header
          _
        $region61: #{tpu_custom_call.1} parent=51 // loop_header
          %s1187 = sphi 0, %s1191
          %p1188 = scmp.ge.s32.totalorder %s1187, 2
          %v1192 = vphi 0.0, %v1337
          %v1193 = vphi 0.0, %v1338
          %v1194 = vphi 0.0, %v1452
          %v1195 = vphi 0.0, %v1453
          %v1196 = vphi 0.0, %v1461
          %v1197 = vphi 0.0, %v1462
        $region62: #{tpu_custom_call.1} parent=51 // loop_header_branch
          %1190 = sbr.rel (%p1188) target = $region66
        $region63: #{tpu_custom_call.1} parent=51 // loop_body
          %s1198 = smul.u32 %s1187, 2
          %s1199 = smul.addr %s1198, 8
          %s1200 = scalar_lea.vmem [#allocation2], %s1199
          %v1201 = vld [vmem:[%s1200] sm:$0xff]
          %v1202 = vld [vmem:[%s1200 + $0x8] sm:$0xff]
          %s1203 = smul.addr %s1198, 8
          %s1204 = scalar_lea.vmem [#allocation3], %s1203
          %v1205 = vld [vmem:[%s1204] sm:$0xff]
          %v1206 = vld [vmem:[%s1204 + $0x8] sm:$0xff]
          %s1207 = smul.u32 %s1187, 8
          %s1208 = scalar_lea.vmem [#allocation4], %s1207
          %v1209 = vld [vmem:[%s1208] sm:$0xff]
          %s1210 = scalar_lea.vmem %s544, %s1207
          %v1211 = vld [vmem:[%s1210] sm:$0xff]
          %s1212 = scalar_lea.vmem %s554, %s1207
          %v1213 = vld [vmem:[%s1212] sm:$0xff]
          %s1214 = scalar_lea.vmem %s549, %s1207
          %v1215 = vld [vmem:[%s1214] sm:$0xff]
          %v1216 = vcvt.s32.f32 %v1215
          %v1217 = vstv %s1207
          %v1218 = vadd.s32 %v585, %v1217
          %v1220 = vlaneseq
          %v1221 = vshrl.u32 %v1220, 7
          %v1222 = vsub.s32 0, %v1221
          %v1223 = vrot.slane %v569, %v1222
          %v1224 = vlaneseq
          %v1225 = vshrl.u32 %v1224, 7
          %v1226 = vsub.s32 2, %v1225
          %v1227 = vrot.slane %v569, %v1226
          %v1230 = vlaneseq
          %v1231 = vshrl.u32 %v1230, 7
          %v1232 = vsub.s32 0, %v1231
          %v1233 = vrot.slane %v1223, %v1232
          %v1234 = vlaneseq
          %v1235 = vshrl.u32 %v1234, 7
          %v1236 = vsub.s32 0, %v1235
          %v1237 = vrot.slane %v1227, %v1236
          %1239 = vset.pattern.permute.xlu0 0
          %1240 = vperm.xlu0 %1239, %v1211
          %v1241 = vpop.permute.xlu0 %1240
          %v1243 = vsub.f32 %v1233, %v1241
          %v1244 = vsub.f32 %v1237, %v1241
          %v1245 = vlaneseq
          %v1246 = vshrl.u32 %v1245, 7
          %v1247 = vsub.s32 1, %v1246
          %v1248 = vrot.slane %v569, %v1247
          %v1249 = vlaneseq
          %v1250 = vshrl.u32 %v1249, 7
          %v1251 = vsub.s32 3, %v1250
          %v1252 = vrot.slane %v569, %v1251
          %v1255 = vlaneseq
          %v1256 = vshrl.u32 %v1255, 7
          %v1257 = vsub.s32 1, %v1256
          %v1258 = vrot.slane %v1248, %v1257
          %v1259 = vlaneseq
          %v1260 = vshrl.u32 %v1259, 7
          %v1261 = vsub.s32 1, %v1260
          %v1262 = vrot.slane %v1252, %v1261
          %1263 = vset.pattern.permute.xlu0 1
          %1264 = vperm.xlu0 %1263, %v1211
          %v1265 = vpop.permute.xlu0 %1264
          %v1267 = vsub.f32 %v1258, %v1265
          %v1268 = vsub.f32 %v1262, %v1265
          %v1269 = vmin.f32 %v1243, %v1267
          %v1270 = vmin.f32 %v1244, %v1268
          %1271 = vset.pattern.permute.xlu0 2
          %1272 = vperm.xlu0 %1271, %v1211
          %v1273 = vpop.permute.xlu0 %1272
          %v1275 = vsub.f32 %v1273, %v1233
          %v1276 = vsub.f32 %v1273, %v1237
          %1277 = vset.pattern.permute.xlu0 3
          %1278 = vperm.xlu0 %1277, %v1211
          %v1279 = vpop.permute.xlu0 %1278
          %v1281 = vsub.f32 %v1279, %v1258
          %v1282 = vsub.f32 %v1279, %v1262
          %v1283 = vmin.f32 %v1275, %v1281
          %v1284 = vmin.f32 %v1276, %v1282
          %v1285 = vmin.f32 %v1269, %v1283
          %v1286 = vmin.f32 %v1270, %v1284
          %vm1287 = vcmp.gt.f32.partialorder %v1285, 1e-09
          %vm1288 = vcmp.gt.f32.partialorder %v1286, 1e-09
          %vm1289 = vcmp.ne.f32.partialorder %v1213, 0.0
          %v1290 = vsel %vm1289, 1, 0
          %1291 = vset.pattern.permute.xlu0 0
          %1292 = vperm.xlu0 %1291, %v1290
          %v1293 = vpop.permute.xlu0 %1292
          %vm1294 = vcmp.eq.s32.totalorder %v1293, 1
          %vm1295 = vmand %vm1287, %vm1294
          %vm1296 = vmand %vm1288, %vm1294
          %1298 = vset.pattern.permute.xlu0 0
          %1299 = vperm.xlu0 %1298, %v1209
          %v1300 = vpop.permute.xlu0 %1299
          %vm1302 = vcmp.ge.f32.partialorder %v1201, %v1300
          %vm1303 = vcmp.ge.f32.partialorder %v1202, %v1300
          %vm1304 = vmand %vm1302, %vm1295
          %vm1305 = vmand %vm1303, %vm1296
          %v1306 = vsel %vm1304, 1, 0
          %v1307 = vsel %vm1305, 1, 0
          %v1308 = vcvt.s32.f32 %v1306
          %v1309 = vcvt.s32.f32 %v1307
          %vm1310 = vcmp.eq.s32.totalorder %v1218, %v1148
          %vm1311 = vcmp.eq.s32.totalorder %v1218, %v1157
          %v1312 = vsel %vm1310, 1, 0
          %v1313 = vsel %vm1311, 1, 0
          %v1314 = vcvt.s32.f32 %v1312
          %v1315 = vcvt.s32.f32 %v1313
          %v1316 = vsel %vm1176, 1, 0
          %v1317 = vsel %vm1177, 1, 0
          %vm1318 = vcmp.eq.s32.totalorder %v1316, 1
          %vm1319 = vcmp.eq.s32.totalorder %v1317, 1
          %v1320 = vsel %vm1318, %v1314, %v1308
          %v1321 = vsel %vm1319, %v1315, %v1309
          %v1322 = vmul.f32 %v1201, %v1320
          %v1323 = vmul.f32 %v1202, %v1321
          %v1324 = vmax.f32 %v1322, %v1323
          %1325 = vmax.xlane.f32.xlu0 %v1324
          %v1326 = vpop.xlane.xlu0 %1325
          %v1327 = vmul.f32 %v1205, %v1320
          %v1328 = vmul.f32 %v1206, %v1321
          %v1329 = vmax.f32 %v1327, %v1328
          %1330 = vmax.xlane.f32.xlu0 %v1329
          %v1331 = vpop.xlane.xlu0 %1330
          %v1332 = vadd.f32 %v1326, 1e-09
          %v1333 = vrcp.pop %v1332
          %v1334 = vmul.f32 %v1331, %v1333
          %v1335 = vmul.f32 %v1322, %v1334
          %v1336 = vmul.f32 %v1323, %v1334
          %v1337 = vmax.f32 %v1192, %v1335
          %v1338 = vmax.f32 %v1193, %v1336
          %vm1339 = vcmp.eq.s32.totalorder %v1218, %v1184
          %vm1340 = vcmp.eq.s32.totalorder %v1218, %v1185
          %v1341 = vsel %vm1339, 1, 0
          %v1342 = vsel %vm1340, 1, 0
          %v1343 = vcvt.s32.f32 %v1341
          %v1344 = vcvt.s32.f32 %v1342
          %1345 = vxpose.xlu0.b32.start [1/16] %v1211, 128
          %1346 = vxpose.xlu0.b32.cont [2/16] 0.0, 128
          %1347 = vxpose.xlu0.b32.cont [3/16] 0.0, 128
          %1348 = vxpose.xlu0.b32.cont [4/16] 0.0, 128
          %1349 = vxpose.xlu0.b32.cont [5/16] 0.0, 128
          %1350 = vxpose.xlu0.b32.cont [6/16] 0.0, 128
          %1351 = vxpose.xlu0.b32.cont [7/16] 0.0, 128
          %1352 = vxpose.xlu0.b32.cont [8/16] 0.0, 128
          %1353 = vxpose.xlu0.b32.cont [9/16] 0.0, 128
          %1354 = vxpose.xlu0.b32.cont [10/16] 0.0, 128
          %1355 = vxpose.xlu0.b32.cont [11/16] 0.0, 128
          %1356 = vxpose.xlu0.b32.cont [12/16] 0.0, 128
          %1357 = vxpose.xlu0.b32.cont [13/16] 0.0, 128
          %1358 = vxpose.xlu0.b32.cont [14/16] 0.0, 128
          %1359 = vxpose.xlu0.b32.cont [15/16] 0.0, 128
          %1360 = vxpose.xlu0.b32.end [16/16] 0.0, 128
          %v1361 = vpop.trf.xlu0
          %v1362 = vpop.trf.xlu0
          %v1363 = vpop.trf.xlu0
          %v1364 = vpop.trf.xlu0
          %v1365 = vpop.trf.xlu0
          %v1366 = vpop.trf.xlu0
          %v1367 = vpop.trf.xlu0
          %v1368 = vpop.trf.xlu0
          %v1369 = vpop.trf.xlu0
          %v1370 = vpop.trf.xlu0
          %v1371 = vpop.trf.xlu0
          %v1372 = vpop.trf.xlu0
          %v1373 = vpop.trf.xlu0
          %v1374 = vpop.trf.xlu0
          %v1375 = vpop.trf.xlu0
          %v1376 = vpop.trf.xlu0
          %vm1377 = vcmask 64512
          %v1379 = vsel %vm1377, %v1361, 0
          %1381 = vmatprep.subr.mxu0 0.0
          %1382 = vmatpush1.msra.mxu0 0.0
          %1383 = vmatprep.subr.mxu0 0.0
          %1384 = vmatpush1.msra.mxu0 0.0
          %1385 = vmatprep.subr.mxu0 0.0
          %1386 = vmatpush1.msra.mxu0 0.0
          %1387 = vmatprep.subr.mxu0 0.0
          %1388 = vmatpush1.msra.mxu0 0.0
          %1389 = vmatprep.subr.mxu0 0.0
          %1390 = vmatpush1.msra.mxu0 0.0
          %1391 = vmatprep.subr.mxu0 0.0
          %1392 = vmatpush1.msra.mxu0 0.0
          %1393 = vmatprep.subr.mxu0 0.0
          %1394 = vmatpush1.msra.mxu0 0.0
          %1395 = vmatprep.subr.mxu0 0.0
          %1396 = vmatpush1.msra.mxu0 0.0
          %1397 = vmatprep.subr.mxu0 0.0
          %1398 = vmatpush1.msra.mxu0 0.0
          %1399 = vmatprep.subr.mxu0 0.0
          %1400 = vmatpush1.msra.mxu0 0.0
          %1401 = vmatprep.subr.mxu0 0.0
          %1402 = vmatpush1.msra.mxu0 0.0
          %1403 = vmatprep.subr.mxu0 0.0
          %1404 = vmatpush1.msra.mxu0 0.0
          %1405 = vmatprep.subr.mxu0 0.0
          %1406 = vmatpush1.msra.mxu0 0.0
          %1407 = vmatprep.subr.mxu0 0.0
          %1408 = vmatpush1.msra.mxu0 0.0
          %1409 = vmatprep.subr.mxu0 0.0
          %1410 = vmatpush1.msra.mxu0 0.0
          %1411 = vmatprep.subr.mxu0 %v1344
          %1412 = vmatpush1.msra.mxu0 %v1343
          %1413 = vmatprep.subr.mxu0 0.0
          %1414 = vmatpush2.msra.mxu0 0.0
          %1415 = vmatprep.subr.mxu0 0.0
          %1416 = vmatpush2.msra.mxu0 0.0
          %1417 = vmatprep.subr.mxu0 0.0
          %1418 = vmatpush2.msra.mxu0 0.0
          %1419 = vmatprep.subr.mxu0 0.0
          %1420 = vmatpush2.msra.mxu0 0.0
          %1421 = vmatprep.subr.mxu0 0.0
          %1422 = vmatpush2.msra.mxu0 0.0
          %1423 = vmatprep.subr.mxu0 0.0
          %1424 = vmatpush2.msra.mxu0 0.0
          %1425 = vmatprep.subr.mxu0 0.0
          %1426 = vmatpush2.msra.mxu0 0.0
          %1427 = vmatprep.subr.mxu0 0.0
          %1428 = vmatpush2.msra.mxu0 0.0
          %1429 = vmatprep.subr.mxu0 0.0
          %1430 = vmatpush2.msra.mxu0 0.0
          %1431 = vmatprep.subr.mxu0 0.0
          %1432 = vmatpush2.msra.mxu0 0.0
          %1433 = vmatprep.subr.mxu0 0.0
          %1434 = vmatpush2.msra.mxu0 0.0
          %1435 = vmatprep.subr.mxu0 0.0
          %1436 = vmatpush2.msra.mxu0 0.0
          %1437 = vmatprep.subr.mxu0 0.0
          %1438 = vmatpush2.msra.mxu0 0.0
          %1439 = vmatprep.subr.mxu0 0.0
          %1440 = vmatpush2.msra.mxu0 0.0
          %1441 = vmatprep.subr.mxu0 0.0
          %1442 = vmatpush2.msra.mxu0 0.0
          %1443 = vmatprep.subr.mxu0 0.0
          %1444 = vmatpush2.msra.mxu0 0.0
          %1445 = vmatprep.mubr.f32.mxu0 0.0
          %1446 = vmatmul.mubr.f32.gmra.mxu0 %v1379
          %v1447 = vpop.f32.mrf.mxu0
          %v1448 = vadd.f32 0.0, %v1447
          %v1449 = vpop.f32.mrf.mxu0
          %v1450 = vadd.f32 0.0, %v1449
          %1451 = vdwg.mxu0
          %v1452 = vadd.f32 %v1194, %v1448
          %v1453 = vadd.f32 %v1195, %v1450
          %1455 = vset.pattern.permute.xlu0 0
          %1456 = vperm.xlu0 %1455, %v1216
          %v1457 = vpop.permute.xlu0 %1456
          %v1459 = vmul.f32 %v1457, %v1343
          %v1460 = vmul.f32 %v1457, %v1344
          %v1461 = vadd.f32 %v1196, %v1459
          %v1462 = vadd.f32 %v1197, %v1460
        $region64: #{tpu_custom_call.1} parent=51 // loop_footer
          %s1191 = sadd.s32 1, %s1187
        $region65: #{tpu_custom_call.1} parent=51 // loop_footer_branch
          %1186 = sbr.rel target = $region61
        $region66: #{tpu_custom_call.1} parent=51 // loop_exit
          _
        %v1463 = vrot.slane %v1192, 4
        %v1464 = vmax.f32 %v1192, %v1463
        %v1465 = vrot.slane %v1464, 2
        %v1466 = vmax.f32 %v1464, %v1465
        %v1467 = vrot.slane %v1466, 1
        %v1468 = vmax.f32 %v1466, %v1467
        %v1469 = vrot.slane %v1193, 4
        %v1470 = vmax.f32 %v1193, %v1469
        %v1471 = vrot.slane %v1470, 2
        %v1472 = vmax.f32 %v1470, %v1471
        %v1473 = vrot.slane %v1472, 1
        %v1474 = vmax.f32 %v1472, %v1473
        %v1475 = vrot.slane %v1196, 4
        %v1476 = vadd.f32 %v1196, %v1475
        %v1477 = vrot.slane %v1476, 2
        %v1478 = vadd.f32 %v1476, %v1477
        %v1479 = vrot.slane %v1478, 1
        %v1480 = vadd.f32 %v1478, %v1479
        %v1481 = vrot.slane %v1197, 4
        %v1482 = vadd.f32 %v1197, %v1481
        %v1483 = vrot.slane %v1482, 2
        %v1484 = vadd.f32 %v1482, %v1483
        %v1485 = vrot.slane %v1484, 1
        %v1486 = vadd.f32 %v1484, %v1485
        %v1487 = vmax.f32 %v1480, 0.0
        %v1488 = vmax.f32 %v1486, 0.0
        %v1489 = vcvt.f32.s32.to.zero.pseudo %v1487
        %v1490 = vcvt.f32.s32.to.zero.pseudo %v1488
        %v1493 = vcombine.low %v1194, %v1195
        %1495 = vst [vmem:[%s501] sm:$0xff] %v1493
        %v1496 = vcombine.low %v1489, %v1490
        %v1498 = vunpack.c.l.s4 1966171168
        %v1499 = vunpack.c.0.s8 %v1498
        %v1500 = vlaneseq
        %v1501 = vshrl.u32 %v1500, 7
        %v1502 = vsub.s32 %v1499, %v1501
        %v1503 = vrot.slane %v1496, %v1502
        %v1505 = vunpack.c.l.s4 1966171168
        %v1506 = vunpack.c.0.s8 %v1505
        %v1507 = vlaneseq
        %v1508 = vshrl.u32 %v1507, 7
        %v1509 = vsub.s32 %v1506, %v1508
        %v1510 = vrot.slane %v1503, %v1509
        %v1511 = vlaneseq
        %vm1512 = vcmp.ge.s32.totalorder %v1511, 0
        %vm1513 = vcmp.lt.s32.totalorder %v1511, 256
        %vm1514 = vmand %vm1512, %vm1513
        %1515 = vst.msk [vmem:[%s508] sm:$0x3] %vm1514, %v1510
        %v1518 = vcombine.low %v1178, %v1179
        %v1520 = vunpack.c.l.s4 1966171168
        %v1521 = vunpack.c.0.s8 %v1520
        %v1522 = vlaneseq
        %v1523 = vshrl.u32 %v1522, 7
        %v1524 = vsub.s32 %v1521, %v1523
        %v1525 = vrot.slane %v1518, %v1524
        %v1527 = vunpack.c.l.s4 1966171168
        %v1528 = vunpack.c.0.s8 %v1527
        %v1529 = vlaneseq
        %v1530 = vshrl.u32 %v1529, 7
        %v1531 = vsub.s32 %v1528, %v1530
        %v1532 = vrot.slane %v1525, %v1531
        %1534 = vst.msk [vmem:[%s515] sm:$0x3] %vm1514, %v1532
        %v1535 = vcombine.low %v1184, %v1185
        %v1537 = vunpack.c.l.s4 1966171168
        %v1538 = vunpack.c.0.s8 %v1537
        %v1539 = vlaneseq
        %v1540 = vshrl.u32 %v1539, 7
        %v1541 = vsub.s32 %v1538, %v1540
        %v1542 = vrot.slane %v1535, %v1541
        %v1544 = vunpack.c.l.s4 1966171168
        %v1545 = vunpack.c.0.s8 %v1544
        %v1546 = vlaneseq
        %v1547 = vshrl.u32 %v1546, 7
        %v1548 = vsub.s32 %v1545, %v1547
        %v1549 = vrot.slane %v1542, %v1548
        %1550 = vst.msk [vmem:[%s522] sm:$0x3] %vm1514, %v1549
        %vm1551 = vcmp.gt.f32.partialorder %v1178, 0.0
        %vm1552 = vcmp.gt.f32.partialorder %v1179, 0.0
        %v1553 = vsel %vm1551, %v1468, 0.0
        %v1554 = vsel %vm1552, %v1474, 0.0
        %v1557 = vcombine.low %v1553, %v1554
        %v1559 = vunpack.c.l.s4 1966171168
        %v1560 = vunpack.c.0.s8 %v1559
        %v1561 = vlaneseq
        %v1562 = vshrl.u32 %v1561, 7
        %v1563 = vsub.s32 %v1560, %v1562
        %v1564 = vrot.slane %v1557, %v1563
        %v1566 = vunpack.c.l.s4 1966171168
        %v1567 = vunpack.c.0.s8 %v1566
        %v1568 = vlaneseq
        %v1569 = vshrl.u32 %v1568, 7
        %v1570 = vsub.s32 %v1567, %v1569
        %v1571 = vrot.slane %v1564, %v1570
        %1573 = vst.msk [vmem:[%s529] sm:$0x3] %vm1514, %v1571
        %s1574 = sand.u32 %s244, 1
        %s1575 = scalar_lea.sflag [#allocation6], %s1574
        %s1576 = sand.u32 %s244, 1
        %s1577 = smul.addr %s1576, 8
        %s1578 = scalar_lea.vmem [#allocation5], %s1577
        %s1579 = sand.u32 %s33, 1
        %s1580 = scalar_lea.sflag [#allocation8], %s1579
        %s1581 = sand.u32 %s270, 1
        %s1582 = smul.addr %s1581, 2
        %s1583 = scalar_lea.vmem [#allocation7], %s1582
        %s1584 = sand.u32 %s33, 1
        %s1585 = scalar_lea.sflag [#allocation8], %s1584
        %s1586 = sand.u32 %s296, 1
        %s1587 = smul.addr %s1586, 2
        %s1588 = scalar_lea.vmem [#allocation9], %s1587
        %s1589 = sand.u32 %s33, 1
        %s1590 = scalar_lea.sflag [#allocation11], %s1589
        %s1591 = sand.u32 %s322, 1
        %s1592 = smul.addr %s1591, 2
        %s1593 = scalar_lea.vmem [#allocation10], %s1592
        %s1594 = sand.u32 %s33, 1
        %s1595 = scalar_lea.sflag [#allocation11], %s1594
        %s1596 = sand.u32 %s348, 1
        %s1597 = smul.addr %s1596, 2
        %s1598 = scalar_lea.vmem [#allocation12], %s1597
        // Predicated region
        $region67: #{tpu_custom_call.1} parent=51 // pred_check
          %p1599 = pneg %p254
        $region68: #{tpu_custom_call.1} parent=51 // pred_check_branch
          %1601 = sbr.rel (%p1599) target = $region70
        $region69: #{tpu_custom_call.1} parent=51 // pred_region
          %s1603 = ssub.s32 128, 128
          %1604 = vsyncadd %s1575, %s1603
          %s1605 = smul.addr %s33, 2
          %s1606 = smul.addr %s1605, 64
          %s1607 = scalar_lea.hbm %s8, %s1606
          %s1609 = sshll.u32 %s1578, 4
          %s1610 = int_to_ptr.vmem [resolvable:$true] %s1609
          %1612 = dma.vmem_to_hbm [thread:$0]  %s1610, 128, %s1607, %s1575
        $region70: #{tpu_custom_call.1} parent=51 // pred_fallthru
          _
        // Predicated region
        $region71: #{tpu_custom_call.1} parent=51 // pred_check
          %p1613 = pneg %p280
        $region72: #{tpu_custom_call.1} parent=51 // pred_check_branch
          %1615 = sbr.rel (%p1613) target = $region74
        $region73: #{tpu_custom_call.1} parent=51 // pred_region
          %s1617 = ssub.s32 32, 32
          %1618 = vsyncadd %s1580, %s1617
          %s1619 = smul.addr %s33, 2
          %s1620 = smul.addr %s1619, 16
          %s1621 = scalar_lea.hbm %s9, %s1620
          %s1623 = sshll.u32 %s1583, 4
          %s1624 = int_to_ptr.vmem [resolvable:$true] %s1623
          %1626 = dma.vmem_to_hbm [thread:$0]  %s1624, 32, %s1621, %s1580
        $region74: #{tpu_custom_call.1} parent=51 // pred_fallthru
          _
        // Predicated region
        $region75: #{tpu_custom_call.1} parent=51 // pred_check
          %p1627 = pneg %p306
        $region76: #{tpu_custom_call.1} parent=51 // pred_check_branch
          %1629 = sbr.rel (%p1627) target = $region78
        $region77: #{tpu_custom_call.1} parent=51 // pred_region
          %s1631 = ssub.s32 32, 32
          %1632 = vsyncadd %s1585, %s1631
          %s1633 = smul.addr %s33, 2
          %s1634 = smul.addr %s1633, 16
          %s1635 = scalar_lea.hbm %s10, %s1634
          %s1637 = sshll.u32 %s1588, 4
          %s1638 = int_to_ptr.vmem [resolvable:$true] %s1637
          %1640 = dma.vmem_to_hbm [thread:$0]  %s1638, 32, %s1635, %s1585
        $region78: #{tpu_custom_call.1} parent=51 // pred_fallthru
          _
        // Predicated region
        $region79: #{tpu_custom_call.1} parent=51 // pred_check
          %p1641 = pneg %p332
        $region80: #{tpu_custom_call.1} parent=51 // pred_check_branch
          %1643 = sbr.rel (%p1641) target = $region82
        $region81: #{tpu_custom_call.1} parent=51 // pred_region
          %s1645 = ssub.s32 32, 32
          %1646 = vsyncadd %s1590, %s1645
          %s1647 = smul.addr %s33, 2
          %s1648 = smul.addr %s1647, 16
          %s1649 = scalar_lea.hbm %s11, %s1648
          %s1651 = sshll.u32 %s1593, 4
          %s1652 = int_to_ptr.vmem [resolvable:$true] %s1651
          %1654 = dma.vmem_to_hbm [thread:$0]  %s1652, 32, %s1649, %s1590
        $region82: #{tpu_custom_call.1} parent=51 // pred_fallthru
          _
        // Predicated region
        $region83: #{tpu_custom_call.1} parent=51 // pred_check
          %p1655 = pneg %p358
        $region84: #{tpu_custom_call.1} parent=51 // pred_check_branch
          %1657 = sbr.rel (%p1655) target = $region86
        $region85: #{tpu_custom_call.1} parent=51 // pred_region
          %s1659 = ssub.s32 32, 32
          %1660 = vsyncadd %s1595, %s1659
          %s1661 = smul.addr %s33, 2
          %s1662 = smul.addr %s1661, 16
          %s1663 = scalar_lea.hbm %s12, %s1662
          %s1665 = sshll.u32 %s1598, 4
          %s1666 = int_to_ptr.vmem [resolvable:$true] %s1665
          %1668 = dma.vmem_to_hbm [thread:$0]  %s1666, 32, %s1663, %s1595
        $region86: #{tpu_custom_call.1} parent=51 // pred_fallthru
          _
      $region52: #{tpu_custom_call.1} parent=5 // pred_fallthru
        _
      %p1669 = scmp.le.s32.totalorder 2, %s28
      // Predicated region
      $region87: #{tpu_custom_call.1} parent=5 // pred_check
        %p1670 = pneg %p1669
      $region88: #{tpu_custom_call.1} parent=5 // pred_check_branch
        %1672 = sbr.rel (%p1670) target = $region90
      $region89: #{tpu_custom_call.1} parent=5 // pred_region
        %s1673 = ssub.s32 %s28, 2
        // Predicated region
        $region91: #{tpu_custom_call.1} parent=89 // pred_check
          %p1674 = pneg %p260
        $region92: #{tpu_custom_call.1} parent=89 // pred_check_branch
          %1676 = sbr.rel (%p1674) target = $region94
        $region93: #{tpu_custom_call.1} parent=89 // pred_region
          %s1677 = sand.u32 %s245, 1
          %s1678 = scalar_lea.sflag [#allocation6], %s1677
          %s1679 = sand.u32 %s245, 1
          %s1680 = smul.addr %s1679, 8
          %s1681 = scalar_lea.vmem [#allocation5], %s1680
          %1682 = dma.done %s1678, 128
        $region94: #{tpu_custom_call.1} parent=89 // pred_fallthru
          _
        // Predicated region
        $region95: #{tpu_custom_call.1} parent=89 // pred_check
          %p1683 = pneg %p286
        $region96: #{tpu_custom_call.1} parent=89 // pred_check_branch
          %1685 = sbr.rel (%p1683) target = $region98
        $region97: #{tpu_custom_call.1} parent=89 // pred_region
          %s1686 = sand.u32 %s34, 1
          %s1687 = scalar_lea.sflag [#allocation8], %s1686
          %s1688 = sand.u32 %s271, 1
          %s1689 = smul.addr %s1688, 2
          %s1690 = scalar_lea.vmem [#allocation7], %s1689
          %1691 = dma.done %s1687, 32
        $region98: #{tpu_custom_call.1} parent=89 // pred_fallthru
          _
        // Predicated region
        $region99: #{tpu_custom_call.1} parent=89 // pred_check
          %p1692 = pneg %p312
        $region100: #{tpu_custom_call.1} parent=89 // pred_check_branch
          %1694 = sbr.rel (%p1692) target = $region102
        $region101: #{tpu_custom_call.1} parent=89 // pred_region
          %s1695 = sand.u32 %s34, 1
          %s1696 = scalar_lea.sflag [#allocation8], %s1695
          %s1697 = sand.u32 %s297, 1
          %s1698 = smul.addr %s1697, 2
          %s1699 = scalar_lea.vmem [#allocation9], %s1698
          %1700 = dma.done %s1696, 32
        $region102: #{tpu_custom_call.1} parent=89 // pred_fallthru
          _
        // Predicated region
        $region103: #{tpu_custom_call.1} parent=89 // pred_check
          %p1701 = pneg %p338
        $region104: #{tpu_custom_call.1} parent=89 // pred_check_branch
          %1703 = sbr.rel (%p1701) target = $region106
        $region105: #{tpu_custom_call.1} parent=89 // pred_region
          %s1704 = sand.u32 %s34, 1
          %s1705 = scalar_lea.sflag [#allocation11], %s1704
          %s1706 = sand.u32 %s323, 1
          %s1707 = smul.addr %s1706, 2
          %s1708 = scalar_lea.vmem [#allocation10], %s1707
          %1709 = dma.done %s1705, 32
        $region106: #{tpu_custom_call.1} parent=89 // pred_fallthru
          _
        // Predicated region
        $region107: #{tpu_custom_call.1} parent=89 // pred_check
          %p1710 = pneg %p364
        $region108: #{tpu_custom_call.1} parent=89 // pred_check_branch
          %1712 = sbr.rel (%p1710) target = $region110
        $region109: #{tpu_custom_call.1} parent=89 // pred_region
          %s1713 = sand.u32 %s34, 1
          %s1714 = scalar_lea.sflag [#allocation11], %s1713
          %s1715 = sand.u32 %s349, 1
          %s1716 = smul.addr %s1715, 2
          %s1717 = scalar_lea.vmem [#allocation12], %s1716
          %1718 = dma.done %s1714, 32
        $region110: #{tpu_custom_call.1} parent=89 // pred_fallthru
          _
      $region90: #{tpu_custom_call.1} parent=5 // pred_fallthru
        _
    $region6: #{tpu_custom_call.1} parent=1 // loop_footer
      %s32 = sadd.s32 1, %s28
    $region7: #{tpu_custom_call.1} parent=1 // loop_footer_branch
      %27 = sbr.rel target = $region3
    $region8: #{tpu_custom_call.1} parent=1 // loop_exit
      _
    %1719 = vsyncpa [#allocation6], 1
    %s1720 = scalar_lea.sflag [#allocation6], 1
    %1721 = vsyncpa %s1720, 1
    %1722 = vsyncpa [#allocation8], 1
    %s1723 = scalar_lea.sflag [#allocation8], 1
    %1724 = vsyncpa %s1723, 1
    %1725 = vsyncpa [#allocation11], 1
    %s1726 = scalar_lea.sflag [#allocation11], 1
    %1727 = vsyncpa %s1726, 1

</llo_original>
